<compile_context>
chip_gen: v7x
topology: tpu7x:2x2x1
jax: 0.10.0
libtpu: 0.0.40
codegen_flags: <defaults>
</compile_context>

<pallas_src>
import functools

import jax
import jax.numpy as jnp
from jax.experimental import pallas as pl
from jax.experimental.pallas import tpu as pltpu

_C1 = 0.01 ** 2
_C2 = 0.03 ** 2


def _photo_kernel(x_ref, y_ref, l1_ref, ssim_ref, *, H, W):
    """x_ref / y_ref: (P, H, W) un-padded planes (predictions / targets).
    l1_ref / ssim_ref: (1, H, W) per-pixel partial-sum accumulators, resident
    across the inner ("arbitrary") grid axis for the current chunk."""

    @pl.when(pl.program_id(1) == 0)
    def _():
        l1_ref[...] = jnp.zeros_like(l1_ref)
        ssim_ref[...] = jnp.zeros_like(ssim_ref)

    x = x_ref[...].astype(jnp.float32)
    y = y_ref[...].astype(jnp.float32)
    P = x.shape[0]

    # ---- L1 partial: per-pixel sum over the P planes of this block (VPU). ----
    l1_ref[...] += jnp.sum(jnp.abs(x - y), axis=0, keepdims=True)

    # ---- Separable reflect-padded 3x3 box filter, applied once to the ----
    # ---- stacked tensor [x, y, x*x, y*y, x*y] of shape (5P, H, W).      ----
    z = jnp.concatenate([x, y, x * x, y * y, x * y], axis=0)

    # vertical (sublane) 3-tap with reflection: neighbor of row 0 is row 1,
    # neighbor of row H-1 is row H-2.
    up = jnp.concatenate([z[:, 1:2, :], z[:, :H - 1, :]], axis=1)          # z[i-1]
    down = jnp.concatenate([z[:, 1:, :], z[:, H - 2:H - 1, :]], axis=1)    # z[i+1]
    v = up + z + down

    # horizontal (lane) 3-tap with reflection.
    left = jnp.concatenate([v[:, :, 1:2], v[:, :, :W - 1]], axis=2)        # v[j-1]
    right = jnp.concatenate([v[:, :, 1:], v[:, :, W - 2:W - 1]], axis=2)   # v[j+1]
    b = (left + v + right) * (1.0 / 9.0)

    mu_x = b[0:P]
    mu_y = b[P:2 * P]
    sigma_x = b[2 * P:3 * P] - mu_x * mu_x
    sigma_y = b[3 * P:4 * P] - mu_y * mu_y
    sigma_xy = b[4 * P:5 * P] - mu_x * mu_y

    ssim_n = (2.0 * mu_x * mu_y + _C1) * (2.0 * sigma_xy + _C2)
    ssim_d = (mu_x * mu_x + mu_y * mu_y + _C1) * (sigma_x + sigma_y + _C2)

    # EUP approximate reciprocal + one Newton-Raphson refinement (keeps the
    # divide off the VPU; relative error ~1e-6, well within tolerance).
    r = pl.reciprocal(ssim_d, approx=True)
    r = r * (2.0 - ssim_d * r)

    ssim_map = jnp.clip((1.0 - ssim_n * r) * 0.5, 0.0, 1.0)
    ssim_ref[...] += jnp.sum(ssim_map, axis=0, keepdims=True)


def _photometric_sums(x, y):
    """x, y: (N, H, W) planes (predictions, targets), any float dtype.
    Returns (sum |x-y|, sum ssim_map) as f32 scalars over all N*H*W pixels."""
    N, H, W = x.shape

    # Plane batching: budget ~12 MiB for the ~24 live f32 (P,H,W) intermediates.
    bytes_per_plane = H * W * 4
    p_cap = max(1, (12 << 20) // (24 * bytes_per_plane))
    P = int(min(8, p_cap, N))

    # Leading "parallel" chunk axis (megacore on v7x; harmless elsewhere).
    num_chunks = 2 if N > P else 1
    steps = -(-N // (P * num_chunks))
    n_pad = P * num_chunks * steps

    if n_pad != N:
        # Zero planes contribute exactly 0 to both the L1 and SSIM sums
        # (mu = sigma = 0  =>  ssim_n == ssim_d  =>  clamped map == 0).
        pad = ((0, n_pad - N), (0, 0), (0, 0))
        x = jnp.pad(x, pad)
        y = jnp.pad(y, pad)

    kernel = functools.partial(_photo_kernel, H=H, W=W)
    l1_part, ssim_part = pl.pallas_call(
        kernel,
        out_shape=(
            jax.ShapeDtypeStruct((num_chunks, H, W), jnp.float32),
            jax.ShapeDtypeStruct((num_chunks, H, W), jnp.float32),
        ),
        grid_spec=pltpu.PrefetchScalarGridSpec(
            num_scalar_prefetch=0,
            grid=(num_chunks, steps),
            in_specs=[
                pl.BlockSpec((P, H, W), lambda c, i: (c * steps + i, 0, 0)),
                pl.BlockSpec((P, H, W), lambda c, i: (c * steps + i, 0, 0)),
            ],
            out_specs=(
                pl.BlockSpec((1, H, W), lambda c, i: (c, 0, 0)),
                pl.BlockSpec((1, H, W), lambda c, i: (c, 0, 0)),
            ),
        ),
        compiler_params=pltpu.CompilerParams(
            dimension_semantics=("parallel", "arbitrary"),
            vmem_limit_bytes=64 << 20,
        ),
    )(x, y)

    return jnp.sum(l1_part), jnp.sum(ssim_part)


def stereo_photometric_consistency(img, pred_lf, right, left, *,
                                   angular=3, is_ssim=True, w_ssim=0.85):
    """Matches StereoPhotometricConsistency.forward (right/left both given)."""
    B, A2, C, H, W = pred_lf.shape
    assert A2 == angular * angular and C == 3

    center_pred = pred_lf[:, A2 // 2]
    lf = pred_lf.reshape(B, angular, angular, C, H, W)
    right_pred = lf[:, angular // 2, -1]
    left_pred = lf[:, angular // 2, 0]

    def planes(a):
        return a.reshape(-1, H, W)

    # Fuse the three pairs into a single pallas_call (they share the
    # per-pair denominator N*H*W, so one global sum is exact).
    x_all = jnp.concatenate(
        [planes(center_pred), planes(right_pred), planes(left_pred)], axis=0)
    y_all = jnp.concatenate(
        [planes(img), planes(right), planes(left)], axis=0)

    l1_sum, ssim_sum = _photometric_sums(x_all, y_all)

    denom = jnp.float32(B * C * H * W)   # per-pair element count
    photo_loss = l1_sum / denom
    if is_ssim:
        photo_loss = photo_loss + w_ssim * 10.0 * ssim_sum / denom
    return photo_loss


# ---------------------------------------------------------------- reference ---
def _ref_pair_losses(x, y):
    """Pure-JAX reference (same math as the torch module, exact division)."""
    N, H, W = x.shape
    xp = jnp.pad(x, ((0, 0), (1, 1), (1, 1)), mode="reflect")
    yp = jnp.pad(y, ((0, 0), (1, 1), (1, 1)), mode="reflect")

    def box(a):
        s = jnp.zeros((N, H, W), jnp.float32)
        for dy in range(3):
            for dx in range(3):
                s = s + a[:, dy:dy + H, dx:dx + W]
        return s / 9.0

    mu_x, mu_y = box(xp), box(yp)
    sx = box(xp * xp) - mu_x ** 2
    sy = box(yp * yp) - mu_y ** 2
    sxy = box(xp * yp) - mu_x * mu_y
    n = (2 * mu_x * mu_y + _C1) * (2 * sxy + _C2)
    d = (mu_x ** 2 + mu_y ** 2 + _C1) * (sx + sy + _C2)
    ssim = 10.0 * jnp.mean(jnp.clip((1 - n / d) / 2, 0.0, 1.0))
    l1 = jnp.mean(jnp.abs(x - y))
    return l1, ssim


def _ref_forward(img, pred_lf, right, left, angular=3, w_ssim=0.85):
    B, A2, C, H, W = pred_lf.shape
    center = pred_lf[:, A2 // 2]
    lf = pred_lf.reshape(B, angular, angular, C, H, W)
    rp, lp = lf[:, angular // 2, -1], lf[:, angular // 2, 0]
    f = lambda a: a.reshape(-1, H, W).astype(jnp.float32)
    l1c, sc = _ref_pair_losses(f(center), f(img))
    l1r, sr = _ref_pair_losses(f(rp), f(right))
    l1l, sl = _ref_pair_losses(f(lp), f(left))
    return l1c + l1r + l1l + w_ssim * (sc + sl + sr)


if __name__ == "__main__":
    B, angular, C, H, W = 2, 3, 3, 16, 16
    key = jax.random.PRNGKey(0)
    k1, k2, k3, k4 = jax.random.split(key, 4)
    img = jax.random.uniform(k1, (B, C, H, W), jnp.float32)
    pred_lf = jax.random.uniform(k2, (B, angular * angular, C, H, W), jnp.float32)
    right = jax.random.uniform(k3, (B, C, H, W), jnp.float32)
    left = jax.random.uniform(k4, (B, C, H, W), jnp.float32)

    loss = stereo_photometric_consistency(
        img, pred_lf, right, left, angular=angular, is_ssim=True, w_ssim=0.85)
    loss = jax.block_until_ready(loss)

    ref = jax.block_until_ready(
        _ref_forward(img, pred_lf, right, left, angular=angular, w_ssim=0.85))
    assert jnp.allclose(loss, ref, rtol=1e-4, atol=1e-5), (loss, ref)

    print("KERNEL_OK")
</pallas_src>

<mosaic_0001>
module attributes {stable_mosaic.version = 11 : i64} {
  func.func @_photo_kernel(%arg0: i32, %arg1: i32, %arg2: memref<8x16x16xf32, #tpu.memory_space<vmem>>, %arg3: memref<8x16x16xf32, #tpu.memory_space<vmem>>, %arg4: memref<1x16x16xf32, #tpu.memory_space<vmem>>, %arg5: memref<1x16x16xf32, #tpu.memory_space<vmem>>) attributes {dimension_semantics = [#tpu.dimension_semantics<parallel>, #tpu.dimension_semantics<arbitrary>], iteration_bounds = array<i64: 2, 2>, scalar_prefetch = 0 : i64, scratch_operands = 0 : i64, tpu.core_type = #tpu.core_type<tc>, window_params = [{transform_indices = @transform_0, window_bounds = array<i64: 8, 16, 16>}, {transform_indices = @transform_1, window_bounds = array<i64: 8, 16, 16>}, {transform_indices = @transform_2, window_bounds = array<i64: 1, 16, 16>}, {transform_indices = @transform_3, window_bounds = array<i64: 1, 16, 16>}]} {
    %c0_i32 = arith.constant 0 : i32
    %0 = arith.cmpi eq, %arg1, %c0_i32 : i32
    %1 = arith.extui %0 : i1 to i32
    %c0_i32_0 = arith.constant 0 : i32
    %2 = arith.cmpi ne, %1, %c0_i32_0 : i32
    scf.if %2 {
      %cst_31 = arith.constant 0.000000e+00 : f32
      %83 = vector.broadcast %cst_31 : f32 to vector<1x16x16xf32>
      %c0_32 = arith.constant 0 : index
      %c0_33 = arith.constant 0 : index
      %c0_34 = arith.constant 0 : index
      %84 = vector.load %arg4[%c0_32, %c0_33, %c0_34] : memref<1x16x16xf32, #tpu.memory_space<vmem>>, vector<1x16x16xf32>
      tpu.vector_store %arg4[%c0_32, %c0_33, %c0_34], %83 {strides = array<i32>} : memref<1x16x16xf32, #tpu.memory_space<vmem>>, vector<1x16x16xf32>,
      %cst_35 = arith.constant 0.000000e+00 : f32
      %85 = vector.broadcast %cst_35 : f32 to vector<1x16x16xf32>
      %c0_36 = arith.constant 0 : index
      %c0_37 = arith.constant 0 : index
      %c0_38 = arith.constant 0 : index
      %86 = vector.load %arg5[%c0_36, %c0_37, %c0_38] : memref<1x16x16xf32, #tpu.memory_space<vmem>>, vector<1x16x16xf32>
      tpu.vector_store %arg5[%c0_36, %c0_37, %c0_38], %85 {strides = array<i32>} : memref<1x16x16xf32, #tpu.memory_space<vmem>>, vector<1x16x16xf32>,
    } else {
    }
    %c0 = arith.constant 0 : index
    %c0_1 = arith.constant 0 : index
    %c0_2 = arith.constant 0 : index
    %3 = vector.load %arg2[%c0, %c0_1, %c0_2] : memref<8x16x16xf32, #tpu.memory_space<vmem>>, vector<8x16x16xf32>
    %c0_3 = arith.constant 0 : index
    %c0_4 = arith.constant 0 : index
    %c0_5 = arith.constant 0 : index
    %4 = vector.load %arg3[%c0_3, %c0_4, %c0_5] : memref<8x16x16xf32, #tpu.memory_space<vmem>>, vector<8x16x16xf32>
    %c0_6 = arith.constant 0 : index
    %c0_7 = arith.constant 0 : index
    %c0_8 = arith.constant 0 : index
    %5 = vector.load %arg4[%c0_6, %c0_7, %c0_8] : memref<1x16x16xf32, #tpu.memory_space<vmem>>, vector<1x16x16xf32>
    %6 = arith.subf %3, %4 : vector<8x16x16xf32>
    %7 = math.absf %6 : vector<8x16x16xf32>
    %cst = arith.constant dense<0.000000e+00> : vector<16x16xf32>
    %8 = vector.multi_reduction <add>, %7, %cst [0] : vector<8x16x16xf32> to vector<16x16xf32>
    %9 = vector.shape_cast %8 : vector<16x16xf32> to vector<1x16x16xf32>
    %10 = arith.addf %5, %9 : vector<1x16x16xf32>
    %c0_9 = arith.constant 0 : index
    %c0_10 = arith.constant 0 : index
    %c0_11 = arith.constant 0 : index
    %11 = vector.load %arg4[%c0_9, %c0_10, %c0_11] : memref<1x16x16xf32, #tpu.memory_space<vmem>>, vector<1x16x16xf32>
    tpu.vector_store %arg4[%c0_9, %c0_10, %c0_11], %10 {strides = array<i32>} : memref<1x16x16xf32, #tpu.memory_space<vmem>>, vector<1x16x16xf32>,
    %12 = arith.mulf %3, %3 : vector<8x16x16xf32>
    %13 = arith.mulf %4, %4 : vector<8x16x16xf32>
    %14 = arith.mulf %3, %4 : vector<8x16x16xf32>
    %15 = tpu.concatenate %3, %4, %12, %13, %14 in 0 : vector<8x16x16xf32>, vector<8x16x16xf32>, vector<8x16x16xf32>, vector<8x16x16xf32>, vector<8x16x16xf32> -> vector<40x16x16xf32>
    %16 = vector.extract_strided_slice %15 {offsets = [0, 1, 0], sizes = [40, 1, 16], strides = [1, 1, 1]} : vector<40x16x16xf32> to vector<40x1x16xf32>
    %17 = vector.extract_strided_slice %15 {offsets = [0, 0, 0], sizes = [40, 15, 16], strides = [1, 1, 1]} : vector<40x16x16xf32> to vector<40x15x16xf32>
    %18 = tpu.concatenate %16, %17 in 1 : vector<40x1x16xf32>, vector<40x15x16xf32> -> vector<40x16x16xf32>
    %19 = vector.extract_strided_slice %15 {offsets = [0, 1, 0], sizes = [40, 15, 16], strides = [1, 1, 1]} : vector<40x16x16xf32> to vector<40x15x16xf32>
    %20 = vector.extract_strided_slice %15 {offsets = [0, 14, 0], sizes = [40, 1, 16], strides = [1, 1, 1]} : vector<40x16x16xf32> to vector<40x1x16xf32>
    %21 = tpu.concatenate %19, %20 in 1 : vector<40x15x16xf32>, vector<40x1x16xf32> -> vector<40x16x16xf32>
    %22 = arith.addf %18, %15 : vector<40x16x16xf32>
    %23 = arith.addf %22, %21 : vector<40x16x16xf32>
    %24 = vector.extract_strided_slice %23 {offsets = [0, 0, 1], sizes = [40, 16, 1], strides = [1, 1, 1]} : vector<40x16x16xf32> to vector<40x16x1xf32>
    %25 = vector.extract_strided_slice %23 {offsets = [0, 0, 0], sizes = [40, 16, 15], strides = [1, 1, 1]} : vector<40x16x16xf32> to vector<40x16x15xf32>
    %26 = tpu.concatenate %24, %25 in 2 : vector<40x16x1xf32>, vector<40x16x15xf32> -> vector<40x16x16xf32>
    %27 = vector.extract_strided_slice %23 {offsets = [0, 0, 1], sizes = [40, 16, 15], strides = [1, 1, 1]} : vector<40x16x16xf32> to vector<40x16x15xf32>
    %28 = vector.extract_strided_slice %23 {offsets = [0, 0, 14], sizes = [40, 16, 1], strides = [1, 1, 1]} : vector<40x16x16xf32> to vector<40x16x1xf32>
    %29 = tpu.concatenate %27, %28 in 2 : vector<40x16x15xf32>, vector<40x16x1xf32> -> vector<40x16x16xf32>
    %30 = arith.addf %26, %23 : vector<40x16x16xf32>
    %31 = arith.addf %30, %29 : vector<40x16x16xf32>
    %cst_12 = arith.constant 0.111111112 : f32
    %32 = vector.broadcast %cst_12 : f32 to vector<40x16x16xf32>
    %33 = arith.mulf %31, %32 : vector<40x16x16xf32>
    %34 = vector.extract_strided_slice %33 {offsets = [0, 0, 0], sizes = [8, 16, 16], strides = [1, 1, 1]} : vector<40x16x16xf32> to vector<8x16x16xf32>
    %35 = vector.extract_strided_slice %33 {offsets = [8, 0, 0], sizes = [8, 16, 16], strides = [1, 1, 1]} : vector<40x16x16xf32> to vector<8x16x16xf32>
    %36 = vector.extract_strided_slice %33 {offsets = [16, 0, 0], sizes = [8, 16, 16], strides = [1, 1, 1]} : vector<40x16x16xf32> to vector<8x16x16xf32>
    %37 = arith.mulf %34, %34 : vector<8x16x16xf32>
    %38 = arith.subf %36, %37 : vector<8x16x16xf32>
    %39 = vector.extract_strided_slice %33 {offsets = [24, 0, 0], sizes = [8, 16, 16], strides = [1, 1, 1]} : vector<40x16x16xf32> to vector<8x16x16xf32>
    %40 = arith.mulf %35, %35 : vector<8x16x16xf32>
    %41 = arith.subf %39, %40 : vector<8x16x16xf32>
    %42 = vector.extract_strided_slice %33 {offsets = [32, 0, 0], sizes = [8, 16, 16], strides = [1, 1, 1]} : vector<40x16x16xf32> to vector<8x16x16xf32>
    %43 = arith.mulf %34, %35 : vector<8x16x16xf32>
    %44 = arith.subf %42, %43 : vector<8x16x16xf32>
    %cst_13 = arith.constant 2.000000e+00 : f32
    %45 = vector.broadcast %cst_13 : f32 to vector<8x16x16xf32>
    %46 = arith.mulf %45, %34 : vector<8x16x16xf32>
    %47 = arith.mulf %46, %35 : vector<8x16x16xf32>
    %cst_14 = arith.constant 9.99999974E-5 : f32
    %48 = vector.broadcast %cst_14 : f32 to vector<8x16x16xf32>
    %49 = arith.addf %47, %48 : vector<8x16x16xf32>
    %cst_15 = arith.constant 2.000000e+00 : f32
    %50 = vector.broadcast %cst_15 : f32 to vector<8x16x16xf32>
    %51 = arith.mulf %50, %44 : vector<8x16x16xf32>
    %cst_16 = arith.constant 8.99999984E-4 : f32
    %52 = vector.broadcast %cst_16 : f32 to vector<8x16x16xf32>
    %53 = arith.addf %51, %52 : vector<8x16x16xf32>
    %54 = arith.mulf %49, %53 : vector<8x16x16xf32>
    %55 = arith.mulf %34, %34 : vector<8x16x16xf32>
    %56 = arith.mulf %35, %35 : vector<8x16x16xf32>
    %57 = arith.addf %55, %56 : vector<8x16x16xf32>
    %cst_17 = arith.constant 9.99999974E-5 : f32
    %58 = vector.broadcast %cst_17 : f32 to vector<8x16x16xf32>
    %59 = arith.addf %57, %58 : vector<8x16x16xf32>
    %60 = arith.addf %38, %41 : vector<8x16x16xf32>
    %cst_18 = arith.constant 8.99999984E-4 : f32
    %61 = vector.broadcast %cst_18 : f32 to vector<8x16x16xf32>
    %62 = arith.addf %60, %61 : vector<8x16x16xf32>
    %63 = arith.mulf %59, %62 : vector<8x16x16xf32>
    %64 = tpu.reciprocal %63 {approx = true} : vector<8x16x16xf32> -> vector<8x16x16xf32>
    %65 = arith.mulf %63, %64 : vector<8x16x16xf32>
    %cst_19 = arith.constant 2.000000e+00 : f32
    %66 = vector.broadcast %cst_19 : f32 to vector<8x16x16xf32>
    %67 = arith.subf %66, %65 : vector<8x16x16xf32>
    %68 = arith.mulf %64, %67 : vector<8x16x16xf32>
    %69 = arith.mulf %54, %68 : vector<8x16x16xf32>
    %cst_20 = arith.constant 1.000000e+00 : f32
    %70 = vector.broadcast %cst_20 : f32 to vector<8x16x16xf32>
    %71 = arith.subf %70, %69 : vector<8x16x16xf32>
    %cst_21 = arith.constant 5.000000e-01 : f32
    %72 = vector.broadcast %cst_21 : f32 to vector<8x16x16xf32>
    %73 = arith.mulf %71, %72 : vector<8x16x16xf32>
    %cst_22 = arith.constant 0.000000e+00 : f32
    %cst_23 = arith.constant 1.000000e+00 : f32
    %74 = vector.broadcast %cst_22 : f32 to vector<8x16x16xf32>
    %75 = arith.maximumf %74, %73 : vector<8x16x16xf32>
    %76 = vector.broadcast %cst_23 : f32 to vector<8x16x16xf32>
    %77 = arith.minimumf %76, %75 : vector<8x16x16xf32>
    %c0_24 = arith.constant 0 : index
    %c0_25 = arith.constant 0 : index
    %c0_26 = arith.constant 0 : index
    %78 = vector.load %arg5[%c0_24, %c0_25, %c0_26] : memref<1x16x16xf32, #tpu.memory_space<vmem>>, vector<1x16x16xf32>
    %cst_27 = arith.constant dense<0.000000e+00> : vector<16x16xf32>
    %79 = vector.multi_reduction <add>, %77, %cst_27 [0] : vector<8x16x16xf32> to vector<16x16xf32>
    %80 = vector.shape_cast %79 : vector<16x16xf32> to vector<1x16x16xf32>
    %81 = arith.addf %78, %80 : vector<1x16x16xf32>
    %c0_28 = arith.constant 0 : index
    %c0_29 = arith.constant 0 : index
    %c0_30 = arith.constant 0 : index
    %82 = vector.load %arg5[%c0_28, %c0_29, %c0_30] : memref<1x16x16xf32, #tpu.memory_space<vmem>>, vector<1x16x16xf32>
    tpu.vector_store %arg5[%c0_28, %c0_29, %c0_30], %81 {strides = array<i32>} : memref<1x16x16xf32, #tpu.memory_space<vmem>>, vector<1x16x16xf32>,
    return
  }
  func.func @transform_0(%arg0: i32, %arg1: i32) -> (i32, i32, i32) {
    %c2_i32 = arith.constant 2 : i32
    %0 = arith.muli %arg0, %c2_i32 : i32
    %1 = arith.addi %0, %arg1 : i32
    %c0_i32 = arith.constant 0 : i32
    %c0_i32_0 = arith.constant 0 : i32
    %c0_i32_1 = arith.constant 0 : i32
    return %1, %c0_i32, %c0_i32_0 : i32, i32, i32
  }
  func.func @transform_1(%arg0: i32, %arg1: i32) -> (i32, i32, i32) {
    %c2_i32 = arith.constant 2 : i32
    %0 = arith.muli %arg0, %c2_i32 : i32
    %1 = arith.addi %0, %arg1 : i32
    %c0_i32 = arith.constant 0 : i32
    %c0_i32_0 = arith.constant 0 : i32
    %c0_i32_1 = arith.constant 0 : i32
    return %1, %c0_i32, %c0_i32_0 : i32, i32, i32
  }
  func.func @transform_2(%arg0: i32, %arg1: i32) -> (i32, i32, i32) {
    %c0_i32 = arith.constant 0 : i32
    %c0_i32_0 = arith.constant 0 : i32
    %c0_i32_1 = arith.constant 0 : i32
    return %arg0, %c0_i32, %c0_i32_0 : i32, i32, i32
  }
  func.func @transform_3(%arg0: i32, %arg1: i32) -> (i32, i32, i32) {
    %c0_i32 = arith.constant 0 : i32
    %c0_i32_0 = arith.constant 0 : i32
    %c0_i32_1 = arith.constant 0 : i32
    return %arg0, %c0_i32, %c0_i32_0 : i32, i32, i32
  }
}

</mosaic_0001>

<llo_original>
// kernel: tpu_custom_call.1
$region0: #{tpu_custom_call.1}
  #allocation0 [shape = 'u32[]', space=smem, size = 0x4, offset = 0x4, fixed_abs, tag = 'smem constant byte address 0x4 - core index']
  #allocation1 [shape = 'u32[144,128]{1,0:T(1,128)}', space=vmem, size = 0x12000, scoped, tag = 'internal scratch']
  %s0 = inlined_call_operand.hbm [shape: f32[32,16,16], index: 0, kind: input, shape index: {}]
  %s1 = inlined_call_operand.hbm [shape: f32[32,16,16], index: 1, kind: input, shape index: {}]
  %s2 = inlined_call_operand.hbm [shape: f32[2,16,16], index: 2, kind: output, shape index: {0}]
  %s3 = inlined_call_operand.hbm [shape: f32[2,16,16], index: 3, kind: output, shape index: {1}]
  %4 = xla_tuple %s2, %s3
  %s5 = sld [smem:[#allocation0]]
  $region61: #{tpu_custom_call.1} parent=0
    _
  %s7 = ssub.s32 1, %s5
  %s8 = scalar_select 0, %s7, %s5
  $region1: #{tpu_custom_call.1} parent=0
    #allocation2 [shape = 'u8[131072]{0}', space=vmem, size = 0x20000, scoped, tag = 'input window, operand 0']
    #allocation3 [shape = 's32[2]{0}', space=sflag, size = 0x8, scoped, tag = 'scoped memory for tpu_custom_call.1']
    #allocation4 [shape = 's32[2]{0}', space=sflag, size = 0x8, scoped, tag = 'scoped memory for tpu_custom_call.1']
    #allocation5 [shape = 'u8[131072]{0}', space=vmem, size = 0x20000, scoped, tag = 'input window, operand 1']
    #allocation6 [shape = 's32[2]{0}', space=sflag, size = 0x8, scoped, tag = 'scoped memory for tpu_custom_call.1']
    #allocation7 [shape = 'u8[16384]{0}', space=vmem, size = 0x4000, scoped, tag = 'output window, operand 0']
    #allocation8 [shape = 'u8[16384]{0}', space=vmem, size = 0x4000, scoped, tag = 'output window, operand 1']
    #allocation9 [shape = 's32[2]{0}', space=sflag, size = 0x8, scoped, tag = 'scoped memory for tpu_custom_call.1']
    %9 = vsyncpa [#allocation3], 0
    %s10 = scalar_lea.sflag [#allocation3], 1
    %11 = vsyncpa %s10, 0
    %12 = vsyncpa [#allocation6], 0
    %s13 = scalar_lea.sflag [#allocation6], 1
    %14 = vsyncpa %s13, 0
    %15 = vsyncpa [#allocation4], 0
    %s16 = scalar_lea.sflag [#allocation4], 1
    %17 = vsyncpa %s16, 0
    %18 = vsyncpa [#allocation9], 0
    %s19 = scalar_lea.sflag [#allocation9], 1
    %20 = vsyncpa %s19, 0
    loop: start=0, step=1, limit=6
    $region2: #{tpu_custom_call.1} parent=1 // loop_pre_header
      _
    $region3: #{tpu_custom_call.1} parent=1 // loop_header
      %s22 = sphi 0, %s26
      %p23 = scmp.ge.s32.totalorder %s22, 6
      %s29 = sphi 0, %s41
      %s30 = sphi 0, %s37
      %s31 = sphi 0, %s29
      %s32 = sphi 0, %s30
      %s33 = sphi 0, %s31
      %s34 = sphi 0, %s32
      %s48 = sphi 0, %s50
      %s51 = sphi 0, %s48
      %s52 = sphi 0, %s51
      %s68 = sphi 0, %s52
      %s78 = sphi 0, %s80
      %s81 = sphi 0, %s78
      %s82 = sphi 0, %s81
      %s98 = sphi 0, %s82
      %s104 = sphi 0, %s106
      %s107 = sphi 0, %s104
      %s108 = sphi 0, %s107
      %s124 = sphi 0, %s108
      %s130 = sphi 0, %s132
      %s133 = sphi 0, %s130
      %s134 = sphi 0, %s133
      %s150 = sphi 0, %s134
    $region4: #{tpu_custom_call.1} parent=1 // loop_header_branch
      %25 = sbr.rel (%p23) target = $region8
    $region5: #{tpu_custom_call.1} parent=1 // loop_body
      %s27 = ssub.s32 %s22, 1
      %s28 = ssub.s32 %s22, 2
      %s35 = sadd.s32 1, %s30
      %p36 = scmp.ge.s32.totalorder %s35, 2
      %s37 = scalar_select %p36, 0, %s35
      %s38 = sadd.s32 1, %s29
      %s39 = scalar_select %p36, %s38, %s29
      %p40 = scmp.ge.s32.totalorder %s39, 2
      %s41 = scalar_select %p40, 0, %s39
      %s42 = smul.u32 %s29, 2
      %s43 = sadd.s32 %s42, %s30
      %s44 = smul.u32 %s41, 2
      %s45 = sadd.s32 %s44, %s37
      %s46 = ssub.s32 %s43, %s45
      %p47 = scmp.eq.s32.totalorder %s46, 0
      %s49 = sadd.s32 %s48, 1
      %s50 = scalar_select %p47, %s48, %s49
      %p53 = pneg %p47
      %p54 = scmp.eq.s32.totalorder %s22, 3
      %p55 = por %p53, %p54
      %p56 = scmp.ne.s32.totalorder %s48, %s51
      %p57 = scmp.eq.s32.totalorder %s22, 0
      %p58 = por %p56, %p57
      %p59 = scmp.ne.s32.totalorder %s48, %s51
      %p60 = scmp.eq.s32.totalorder %s27, 3
      %p61 = por %p59, %p60
      %p62 = scmp.ne.s32.totalorder %s51, %s52
      %p63 = scmp.eq.s32.totalorder %s27, 0
      %p64 = por %p62, %p63
      %p65 = scmp.ne.s32.totalorder %s51, %s52
      %p66 = scmp.eq.s32.totalorder %s28, 3
      %p67 = por %p65, %p66
      %p69 = scmp.ne.s32.totalorder %s52, %s68
      %p70 = scmp.eq.s32.totalorder %s28, 0
      %p71 = por %p69, %p70
      %s72 = smul.u32 %s29, 2
      %s73 = sadd.s32 %s72, %s30
      %s74 = smul.u32 %s41, 2
      %s75 = sadd.s32 %s74, %s37
      %s76 = ssub.s32 %s73, %s75
      %p77 = scmp.eq.s32.totalorder %s76, 0
      %s79 = sadd.s32 %s78, 1
      %s80 = scalar_select %p77, %s78, %s79
      %p83 = pneg %p77
      %p84 = scmp.eq.s32.totalorder %s22, 3
      %p85 = por %p83, %p84
      %p86 = scmp.ne.s32.totalorder %s78, %s81
      %p87 = scmp.eq.s32.totalorder %s22, 0
      %p88 = por %p86, %p87
      %p89 = scmp.ne.s32.totalorder %s78, %s81
      %p90 = scmp.eq.s32.totalorder %s27, 3
      %p91 = por %p89, %p90
      %p92 = scmp.ne.s32.totalorder %s81, %s82
      %p93 = scmp.eq.s32.totalorder %s27, 0
      %p94 = por %p92, %p93
      %p95 = scmp.ne.s32.totalorder %s81, %s82
      %p96 = scmp.eq.s32.totalorder %s28, 3
      %p97 = por %p95, %p96
      %p99 = scmp.ne.s32.totalorder %s82, %s98
      %p100 = scmp.eq.s32.totalorder %s28, 0
      %p101 = por %p99, %p100
      %s102 = ssub.s32 %s29, %s41
      %p103 = scmp.eq.s32.totalorder %s102, 0
      %s105 = sadd.s32 %s104, 1
      %s106 = scalar_select %p103, %s104, %s105
      %p109 = pneg %p103
      %p110 = scmp.eq.s32.totalorder %s22, 3
      %p111 = por %p109, %p110
      %p112 = scmp.ne.s32.totalorder %s104, %s107
      %p113 = scmp.eq.s32.totalorder %s22, 0
      %p114 = por %p112, %p113
      %p115 = scmp.ne.s32.totalorder %s104, %s107
      %p116 = scmp.eq.s32.totalorder %s27, 3
      %p117 = por %p115, %p116
      %p118 = scmp.ne.s32.totalorder %s107, %s108
      %p119 = scmp.eq.s32.totalorder %s27, 0
      %p120 = por %p118, %p119
      %p121 = scmp.ne.s32.totalorder %s107, %s108
      %p122 = scmp.eq.s32.totalorder %s28, 3
      %p123 = por %p121, %p122
      %p125 = scmp.ne.s32.totalorder %s108, %s124
      %p126 = scmp.eq.s32.totalorder %s28, 0
      %p127 = por %p125, %p126
      %s128 = ssub.s32 %s29, %s41
      %p129 = scmp.eq.s32.totalorder %s128, 0
      %s131 = sadd.s32 %s130, 1
      %s132 = scalar_select %p129, %s130, %s131
      %p135 = pneg %p129
      %p136 = scmp.eq.s32.totalorder %s22, 3
      %p137 = por %p135, %p136
      %p138 = scmp.ne.s32.totalorder %s130, %s133
      %p139 = scmp.eq.s32.totalorder %s22, 0
      %p140 = por %p138, %p139
      %p141 = scmp.ne.s32.totalorder %s130, %s133
      %p142 = scmp.eq.s32.totalorder %s27, 3
      %p143 = por %p141, %p142
      %p144 = scmp.ne.s32.totalorder %s133, %s134
      %p145 = scmp.eq.s32.totalorder %s27, 0
      %p146 = por %p144, %p145
      %p147 = scmp.ne.s32.totalorder %s133, %s134
      %p148 = scmp.eq.s32.totalorder %s28, 3
      %p149 = por %p147, %p148
      %p151 = scmp.ne.s32.totalorder %s134, %s150
      %p152 = scmp.eq.s32.totalorder %s28, 0
      %p153 = por %p151, %p152
      %p154 = scmp.le.s32.totalorder 1, %s22
      %p155 = scmp.lt.s32.totalorder %s22, 5
      %p156 = pnand %p154, %p155
      %p157 = pneg %p156
      // Predicated region
      $region9: #{tpu_custom_call.1} parent=5 // pred_check
        _
      $region10: #{tpu_custom_call.1} parent=5 // pred_check_branch
        %159 = sbr.rel (%p156) target = $region12
      $region11: #{tpu_custom_call.1} parent=5 // pred_region
        %s160 = ssub.s32 %s22, 1
      $region12: #{tpu_custom_call.1} parent=5 // pred_fallthru
        _
      %p161 = scmp.lt.s32.totalorder %s22, 4
      // Predicated region
      $region13: #{tpu_custom_call.1} parent=5 // pred_check
        %p162 = pneg %p161
      $region14: #{tpu_custom_call.1} parent=5 // pred_check_branch
        %164 = sbr.rel (%p162) target = $region16
      $region15: #{tpu_custom_call.1} parent=5 // pred_region
        // Predicated region
        $region17: #{tpu_custom_call.1} parent=15 // pred_check
          %p165 = pneg %p58
        $region18: #{tpu_custom_call.1} parent=15 // pred_check_branch
          %167 = sbr.rel (%p165) target = $region20
        $region19: #{tpu_custom_call.1} parent=15 // pred_region
          %s168 = sand.u32 %s48, 1
          %s169 = scalar_lea.sflag [#allocation3], %s168
          %s170 = sand.u32 %s48, 1
          %s171 = smul.addr %s170, 128
          %s172 = scalar_lea.vmem [#allocation2], %s171
          %s173 = smul.u32 %s29, 2
          %s174 = sadd.s32 %s173, %s30
          %s175 = smul.u32 8, %s174
          %s177 = ssub.s32 2048, 2048
          %178 = vsyncadd %s169, %s177
          %s179 = smul.addr %s175, 2
          %s180 = smul.addr %s179, 128
          %s181 = scalar_lea.hbm %s0, %s180
          %s182 = sshll.u32 %s172, 4
          %s183 = int_to_ptr.vmem [resolvable:$true] %s182
          %188 = dma.hbm_to_vmem [thread:$0]  %s181, 2048, %s183, %s169, 128, 128, 8
        $region20: #{tpu_custom_call.1} parent=15 // pred_fallthru
          _
        // Predicated region
        $region21: #{tpu_custom_call.1} parent=15 // pred_check
          %p189 = pneg %p88
        $region22: #{tpu_custom_call.1} parent=15 // pred_check_branch
          %191 = sbr.rel (%p189) target = $region24
        $region23: #{tpu_custom_call.1} parent=15 // pred_region
          %s192 = sand.u32 %s78, 1
          %s193 = scalar_lea.sflag [#allocation6], %s192
          %s194 = sand.u32 %s78, 1
          %s195 = smul.addr %s194, 128
          %s196 = scalar_lea.vmem [#allocation5], %s195
          %s197 = smul.u32 %s29, 2
          %s198 = sadd.s32 %s197, %s30
          %s199 = smul.u32 8, %s198
          %s201 = ssub.s32 2048, 2048
          %202 = vsyncadd %s193, %s201
          %s203 = smul.addr %s199, 2
          %s204 = smul.addr %s203, 128
          %s205 = scalar_lea.hbm %s1, %s204
          %s206 = sshll.u32 %s196, 4
          %s207 = int_to_ptr.vmem [resolvable:$true] %s206
          %212 = dma.hbm_to_vmem [thread:$0]  %s205, 2048, %s207, %s193, 128, 128, 8
        $region24: #{tpu_custom_call.1} parent=15 // pred_fallthru
          _
      $region16: #{tpu_custom_call.1} parent=5 // pred_fallthru
        _
      %p213 = scmp.le.s32.totalorder 1, %s22
      %p214 = scmp.lt.s32.totalorder %s22, 5
      %p215 = pnand %p213, %p214
      %p216 = pneg %p215
      // Predicated region
      $region25: #{tpu_custom_call.1} parent=5 // pred_check
        _
      $region26: #{tpu_custom_call.1} parent=5 // pred_check_branch
        %218 = sbr.rel (%p215) target = $region28
      $region27: #{tpu_custom_call.1} parent=5 // pred_region
        %s219 = ssub.s32 %s22, 1
        %s220 = sand.u32 %s51, 1
        %s221 = scalar_lea.sflag [#allocation3], %s220
        %s222 = sand.u32 %s51, 1
        %s223 = smul.addr %s222, 128
        %s224 = scalar_lea.vmem [#allocation2], %s223
        // Predicated region
        $region29: #{tpu_custom_call.1} parent=27 // pred_check
          %p225 = pneg %p64
        $region30: #{tpu_custom_call.1} parent=27 // pred_check_branch
          %227 = sbr.rel (%p225) target = $region32
        $region31: #{tpu_custom_call.1} parent=27 // pred_region
          %228 = dma.done %s221, 2048
        $region32: #{tpu_custom_call.1} parent=27 // pred_fallthru
          _
        %s229 = sand.u32 %s81, 1
        %s230 = scalar_lea.sflag [#allocation6], %s229
        %s231 = sand.u32 %s81, 1
        %s232 = smul.addr %s231, 128
        %s233 = scalar_lea.vmem [#allocation5], %s232
        // Predicated region
        $region33: #{tpu_custom_call.1} parent=27 // pred_check
          %p234 = pneg %p94
        $region34: #{tpu_custom_call.1} parent=27 // pred_check_branch
          %236 = sbr.rel (%p234) target = $region36
        $region35: #{tpu_custom_call.1} parent=27 // pred_region
          %237 = dma.done %s230, 2048
        $region36: #{tpu_custom_call.1} parent=27 // pred_fallthru
          _
        %s238 = sand.u32 %s51, 1
        %s239 = scalar_lea.sflag [#allocation3], %s238
        %s240 = sand.u32 %s51, 1
        %s241 = smul.addr %s240, 128
        %s242 = scalar_lea.vmem [#allocation2], %s241
        %p243 = pneg %p64
        %p244 = pneg %p61
        %s245 = sand.u32 %s81, 1
        %s246 = scalar_lea.sflag [#allocation6], %s245
        %s247 = sand.u32 %s81, 1
        %s248 = smul.addr %s247, 128
        %s249 = scalar_lea.vmem [#allocation5], %s248
        %p250 = pneg %p94
        %p251 = pneg %p91
        %p252 = pneg %p120
        %p253 = pneg %p117
        %s254 = sand.u32 %s107, 1
        %s255 = scalar_lea.sflag [#allocation4], %s254
        %s256 = sand.u32 %s107, 1
        %s257 = smul.addr %s256, 16
        %s258 = scalar_lea.vmem [#allocation7], %s257
        %p259 = pneg %p146
        %p260 = pneg %p143
        %s261 = sand.u32 %s133, 1
        %s262 = scalar_lea.sflag [#allocation9], %s261
        %s263 = sand.u32 %s133, 1
        %s264 = smul.addr %s263, 16
        %s265 = scalar_lea.vmem [#allocation8], %s264
        %s266 = smul.u32 %s31, 2
        %s267 = sadd.s32 %s266, %s32
        %s268 = smul.u32 8, %s267
        %s269 = smul.u32 %s31, 2
        %s270 = sadd.s32 %s269, %s32
        %s271 = smul.u32 8, %s270
        %p272 = scmp.eq.s32.totalorder %s32, 0
        // Predicated region
        $region37: #{tpu_custom_call.1} parent=27 // pred_check
          %p273 = pneg %p272
        $region38: #{tpu_custom_call.1} parent=27 // pred_check_branch
          %275 = sbr.rel (%p273) target = $region40
        $region39: #{tpu_custom_call.1} parent=27 // pred_region
          %vm276 = vcmask 130048
          %277 = vst.msk [vmem:[%s258] sm:$0xff] %vm276, 0.0
          %278 = vst.msk [vmem:[%s258 + $0x8] sm:$0xff] %vm276, 0.0
          %279 = vst.msk [vmem:[%s265] sm:$0xff] %vm276, 0.0
          %280 = vst.msk [vmem:[%s265 + $0x8] sm:$0xff] %vm276, 0.0
        $region40: #{tpu_custom_call.1} parent=27 // pred_fallthru
          _
        %v281 = vld [vmem:[%s224] sm:$0xff]
        %v282 = vld [vmem:[%s224 + $0x8] sm:$0xff]
        %v283 = vld [vmem:[%s224 + $0x10] sm:$0xff]
        %v284 = vld [vmem:[%s224 + $0x18] sm:$0xff]
        %v285 = vld [vmem:[%s224 + $0x20] sm:$0xff]
        %v286 = vld [vmem:[%s224 + $0x28] sm:$0xff]
        %v287 = vld [vmem:[%s224 + $0x30] sm:$0xff]
        %v288 = vld [vmem:[%s224 + $0x38] sm:$0xff]
        %v289 = vld [vmem:[%s224 + $0x40] sm:$0xff]
        %v290 = vld [vmem:[%s224 + $0x48] sm:$0xff]
        %v291 = vld [vmem:[%s224 + $0x50] sm:$0xff]
        %v292 = vld [vmem:[%s224 + $0x58] sm:$0xff]
        %v293 = vld [vmem:[%s224 + $0x60] sm:$0xff]
        %v294 = vld [vmem:[%s224 + $0x68] sm:$0xff]
        %v295 = vld [vmem:[%s224 + $0x70] sm:$0xff]
        %v296 = vld [vmem:[%s224 + $0x78] sm:$0xff]
        %v297 = vld [vmem:[%s233] sm:$0xff]
        %v298 = vld [vmem:[%s233 + $0x8] sm:$0xff]
        %v299 = vld [vmem:[%s233 + $0x10] sm:$0xff]
        %v300 = vld [vmem:[%s233 + $0x18] sm:$0xff]
        %v301 = vld [vmem:[%s233 + $0x20] sm:$0xff]
        %v302 = vld [vmem:[%s233 + $0x28] sm:$0xff]
        %v303 = vld [vmem:[%s233 + $0x30] sm:$0xff]
        %v304 = vld [vmem:[%s233 + $0x38] sm:$0xff]
        %v305 = vld [vmem:[%s233 + $0x40] sm:$0xff]
        %v306 = vld [vmem:[%s233 + $0x48] sm:$0xff]
        %v307 = vld [vmem:[%s233 + $0x50] sm:$0xff]
        %v308 = vld [vmem:[%s233 + $0x58] sm:$0xff]
        %v309 = vld [vmem:[%s233 + $0x60] sm:$0xff]
        %v310 = vld [vmem:[%s233 + $0x68] sm:$0xff]
        %v311 = vld [vmem:[%s233 + $0x70] sm:$0xff]
        %v312 = vld [vmem:[%s233 + $0x78] sm:$0xff]
        %v313 = vld [vmem:[%s258] sm:$0xff]
        %v314 = vld [vmem:[%s258 + $0x8] sm:$0xff]
        %v315 = vsub.f32 %v281, %v297
        %v316 = vsub.f32 %v282, %v298
        %v317 = vsub.f32 %v283, %v299
        %v318 = vsub.f32 %v284, %v300
        %v319 = vsub.f32 %v285, %v301
        %v320 = vsub.f32 %v286, %v302
        %v321 = vsub.f32 %v287, %v303
        %v322 = vsub.f32 %v288, %v304
        %v323 = vsub.f32 %v289, %v305
        %v324 = vsub.f32 %v290, %v306
        %v325 = vsub.f32 %v291, %v307
        %v326 = vsub.f32 %v292, %v308
        %v327 = vsub.f32 %v293, %v309
        %v328 = vsub.f32 %v294, %v310
        %v329 = vsub.f32 %v295, %v311
        %v330 = vsub.f32 %v296, %v312
        %v331 = vand.u32 2147483647, %v315
        %v332 = vand.u32 2147483647, %v316
        %v333 = vand.u32 2147483647, %v317
        %v334 = vand.u32 2147483647, %v318
        %v335 = vand.u32 2147483647, %v319
        %v336 = vand.u32 2147483647, %v320
        %v337 = vand.u32 2147483647, %v321
        %v338 = vand.u32 2147483647, %v322
        %v339 = vand.u32 2147483647, %v323
        %v340 = vand.u32 2147483647, %v324
        %v341 = vand.u32 2147483647, %v325
        %v342 = vand.u32 2147483647, %v326
        %v343 = vand.u32 2147483647, %v327
        %v344 = vand.u32 2147483647, %v328
        %v345 = vand.u32 2147483647, %v329
        %v346 = vand.u32 2147483647, %v330
        %vm347 = vcmask 130048
        %v348 = vsel %vm347, %v331, 0.0
        %v349 = vsel %vm347, %v333, 0.0
        %v350 = vadd.f32 %v348, %v349
        %v351 = vsel %vm347, %v335, 0.0
        %v352 = vadd.f32 %v350, %v351
        %v353 = vsel %vm347, %v337, 0.0
        %v354 = vadd.f32 %v352, %v353
        %v355 = vsel %vm347, %v339, 0.0
        %v356 = vadd.f32 %v354, %v355
        %v357 = vsel %vm347, %v341, 0.0
        %v358 = vadd.f32 %v356, %v357
        %v359 = vsel %vm347, %v343, 0.0
        %v360 = vadd.f32 %v358, %v359
        %v361 = vsel %vm347, %v345, 0.0
        %v362 = vadd.f32 %v360, %v361
        %v363 = vsel %vm347, %v332, 0.0
        %v364 = vsel %vm347, %v334, 0.0
        %v365 = vadd.f32 %v363, %v364
        %v366 = vsel %vm347, %v336, 0.0
        %v367 = vadd.f32 %v365, %v366
        %v368 = vsel %vm347, %v338, 0.0
        %v369 = vadd.f32 %v367, %v368
        %v370 = vsel %vm347, %v340, 0.0
        %v371 = vadd.f32 %v369, %v370
        %v372 = vsel %vm347, %v342, 0.0
        %v373 = vadd.f32 %v371, %v372
        %v374 = vsel %vm347, %v344, 0.0
        %v375 = vadd.f32 %v373, %v374
        %v376 = vsel %vm347, %v346, 0.0
        %v377 = vadd.f32 %v375, %v376
        %v378 = vadd.f32 %v313, %v362
        %v379 = vadd.f32 %v314, %v377
        %380 = vst.msk [vmem:[%s258] sm:$0xff] %vm347, %v378
        %381 = vst.msk [vmem:[%s258 + $0x8] sm:$0xff] %vm347, %v379
        %v382 = vmul.f32 %v281, %v281
        %v383 = vmul.f32 %v282, %v282
        %v384 = vmul.f32 %v283, %v283
        %v385 = vmul.f32 %v284, %v284
        %v386 = vmul.f32 %v285, %v285
        %v387 = vmul.f32 %v286, %v286
        %v388 = vmul.f32 %v287, %v287
        %v389 = vmul.f32 %v288, %v288
        %v390 = vmul.f32 %v289, %v289
        %v391 = vmul.f32 %v290, %v290
        %v392 = vmul.f32 %v291, %v291
        %v393 = vmul.f32 %v292, %v292
        %v394 = vmul.f32 %v293, %v293
        %v395 = vmul.f32 %v294, %v294
        %v396 = vmul.f32 %v295, %v295
        %v397 = vmul.f32 %v296, %v296
        %v398 = vmul.f32 %v297, %v297
        %v399 = vmul.f32 %v298, %v298
        %v400 = vmul.f32 %v299, %v299
        %v401 = vmul.f32 %v300, %v300
        %v402 = vmul.f32 %v301, %v301
        %v403 = vmul.f32 %v302, %v302
        %v404 = vmul.f32 %v303, %v303
        %v405 = vmul.f32 %v304, %v304
        %v406 = vmul.f32 %v305, %v305
        %v407 = vmul.f32 %v306, %v306
        %v408 = vmul.f32 %v307, %v307
        %v409 = vmul.f32 %v308, %v308
        %v410 = vmul.f32 %v309, %v309
        %v411 = vmul.f32 %v310, %v310
        %v412 = vmul.f32 %v311, %v311
        %v413 = vmul.f32 %v312, %v312
        %v414 = vmul.f32 %v281, %v297
        %v415 = vmul.f32 %v282, %v298
        %v416 = vmul.f32 %v283, %v299
        %v417 = vmul.f32 %v284, %v300
        %v418 = vmul.f32 %v285, %v301
        %v419 = vmul.f32 %v286, %v302
        %v420 = vmul.f32 %v287, %v303
        %v421 = vmul.f32 %v288, %v304
        %v422 = vmul.f32 %v289, %v305
        %v423 = vmul.f32 %v290, %v306
        %v424 = vmul.f32 %v291, %v307
        %v425 = vmul.f32 %v292, %v308
        %v426 = vmul.f32 %v293, %v309
        %v427 = vmul.f32 %v294, %v310
        %v428 = vmul.f32 %v295, %v311
        %v429 = vmul.f32 %v296, %v312
        %v470 = vrot.slane %v281, 1
        %v471 = vrot.slane %v283, 1
        %v472 = vrot.slane %v285, 1
        %v473 = vrot.slane %v287, 1
        %v474 = vrot.slane %v289, 1
        %v475 = vrot.slane %v291, 1
        %v476 = vrot.slane %v293, 1
        %v477 = vrot.slane %v295, 1
        %v478 = vrot.slane %v297, 1
        %v479 = vrot.slane %v299, 1
        %v480 = vrot.slane %v301, 1
        %v481 = vrot.slane %v303, 1
        %v482 = vrot.slane %v305, 1
        %v483 = vrot.slane %v307, 1
        %v484 = vrot.slane %v309, 1
        %v485 = vrot.slane %v311, 1
        %v486 = vrot.slane %v382, 1
        %v487 = vrot.slane %v384, 1
        %v488 = vrot.slane %v386, 1
        %v489 = vrot.slane %v388, 1
        %v490 = vrot.slane %v390, 1
        %v491 = vrot.slane %v392, 1
        %v492 = vrot.slane %v394, 1
        %v493 = vrot.slane %v396, 1
        %v494 = vrot.slane %v398, 1
        %v495 = vrot.slane %v400, 1
        %v496 = vrot.slane %v402, 1
        %v497 = vrot.slane %v404, 1
        %v498 = vrot.slane %v406, 1
        %v499 = vrot.slane %v408, 1
        %v500 = vrot.slane %v410, 1
        %v501 = vrot.slane %v412, 1
        %v502 = vrot.slane %v414, 1
        %v503 = vrot.slane %v416, 1
        %v504 = vrot.slane %v418, 1
        %v505 = vrot.slane %v420, 1
        %v506 = vrot.slane %v422, 1
        %v507 = vrot.slane %v424, 1
        %v508 = vrot.slane %v426, 1
        %v509 = vrot.slane %v428, 1
        %vm590 = vcmask 1040384
        %v591 = vrot.slane %v281, 7
        %v592 = vrot.slane %v282, 7
        %v593 = vsel %vm590, %v591, %v592
        %v594 = vrot.slane %v283, 7
        %v595 = vrot.slane %v284, 7
        %v596 = vsel %vm590, %v594, %v595
        %v597 = vrot.slane %v285, 7
        %v598 = vrot.slane %v286, 7
        %v599 = vsel %vm590, %v597, %v598
        %v600 = vrot.slane %v287, 7
        %v601 = vrot.slane %v288, 7
        %v602 = vsel %vm590, %v600, %v601
        %v603 = vrot.slane %v289, 7
        %v604 = vrot.slane %v290, 7
        %v605 = vsel %vm590, %v603, %v604
        %v606 = vrot.slane %v291, 7
        %v607 = vrot.slane %v292, 7
        %v608 = vsel %vm590, %v606, %v607
        %v609 = vrot.slane %v293, 7
        %v610 = vrot.slane %v294, 7
        %v611 = vsel %vm590, %v609, %v610
        %v612 = vrot.slane %v295, 7
        %v613 = vrot.slane %v296, 7
        %v614 = vsel %vm590, %v612, %v613
        %v615 = vrot.slane %v297, 7
        %v616 = vrot.slane %v298, 7
        %v617 = vsel %vm590, %v615, %v616
        %v618 = vrot.slane %v299, 7
        %v619 = vrot.slane %v300, 7
        %v620 = vsel %vm590, %v618, %v619
        %v621 = vrot.slane %v301, 7
        %v622 = vrot.slane %v302, 7
        %v623 = vsel %vm590, %v621, %v622
        %v624 = vrot.slane %v303, 7
        %v625 = vrot.slane %v304, 7
        %v626 = vsel %vm590, %v624, %v625
        %v627 = vrot.slane %v305, 7
        %v628 = vrot.slane %v306, 7
        %v629 = vsel %vm590, %v627, %v628
        %v630 = vrot.slane %v307, 7
        %v631 = vrot.slane %v308, 7
        %v632 = vsel %vm590, %v630, %v631
        %v633 = vrot.slane %v309, 7
        %v634 = vrot.slane %v310, 7
        %v635 = vsel %vm590, %v633, %v634
        %v636 = vrot.slane %v311, 7
        %v637 = vrot.slane %v312, 7
        %v638 = vsel %vm590, %v636, %v637
        %v639 = vrot.slane %v382, 7
        %v640 = vrot.slane %v383, 7
        %v641 = vsel %vm590, %v639, %v640
        %v642 = vrot.slane %v384, 7
        %v643 = vrot.slane %v385, 7
        %v644 = vsel %vm590, %v642, %v643
        %v645 = vrot.slane %v386, 7
        %v646 = vrot.slane %v387, 7
        %v647 = vsel %vm590, %v645, %v646
        %v648 = vrot.slane %v388, 7
        %v649 = vrot.slane %v389, 7
        %v650 = vsel %vm590, %v648, %v649
        %v651 = vrot.slane %v390, 7
        %v652 = vrot.slane %v391, 7
        %v653 = vsel %vm590, %v651, %v652
        %v654 = vrot.slane %v392, 7
        %v655 = vrot.slane %v393, 7
        %v656 = vsel %vm590, %v654, %v655
        %v657 = vrot.slane %v394, 7
        %v658 = vrot.slane %v395, 7
        %v659 = vsel %vm590, %v657, %v658
        %v660 = vrot.slane %v396, 7
        %v661 = vrot.slane %v397, 7
        %v662 = vsel %vm590, %v660, %v661
        %v663 = vrot.slane %v398, 7
        %v664 = vrot.slane %v399, 7
        %v665 = vsel %vm590, %v663, %v664
        %v666 = vrot.slane %v400, 7
        %v667 = vrot.slane %v401, 7
        %v668 = vsel %vm590, %v666, %v667
        %v669 = vrot.slane %v402, 7
        %v670 = vrot.slane %v403, 7
        %v671 = vsel %vm590, %v669, %v670
        %v672 = vrot.slane %v404, 7
        %v673 = vrot.slane %v405, 7
        %v674 = vsel %vm590, %v672, %v673
        %v675 = vrot.slane %v406, 7
        %v676 = vrot.slane %v407, 7
        %v677 = vsel %vm590, %v675, %v676
        %v678 = vrot.slane %v408, 7
        %v679 = vrot.slane %v409, 7
        %v680 = vsel %vm590, %v678, %v679
        %v681 = vrot.slane %v410, 7
        %v682 = vrot.slane %v411, 7
        %v683 = vsel %vm590, %v681, %v682
        %v684 = vrot.slane %v412, 7
        %v685 = vrot.slane %v413, 7
        %v686 = vsel %vm590, %v684, %v685
        %v687 = vrot.slane %v414, 7
        %v688 = vrot.slane %v415, 7
        %v689 = vsel %vm590, %v687, %v688
        %v690 = vrot.slane %v416, 7
        %v691 = vrot.slane %v417, 7
        %v692 = vsel %vm590, %v690, %v691
        %v693 = vrot.slane %v418, 7
        %v694 = vrot.slane %v419, 7
        %v695 = vsel %vm590, %v693, %v694
        %v696 = vrot.slane %v420, 7
        %v697 = vrot.slane %v421, 7
        %v698 = vsel %vm590, %v696, %v697
        %v699 = vrot.slane %v422, 7
        %v700 = vrot.slane %v423, 7
        %v701 = vsel %vm590, %v699, %v700
        %v702 = vrot.slane %v424, 7
        %v703 = vrot.slane %v425, 7
        %v704 = vsel %vm590, %v702, %v703
        %v705 = vrot.slane %v426, 7
        %v706 = vrot.slane %v427, 7
        %v707 = vsel %vm590, %v705, %v706
        %v708 = vrot.slane %v428, 7
        %v709 = vrot.slane %v429, 7
        %v710 = vsel %vm590, %v708, %v709
        %v791 = vsel %vm590, %v470, %v591
        %v792 = vsel %vm590, %v471, %v594
        %v793 = vsel %vm590, %v472, %v597
        %v794 = vsel %vm590, %v473, %v600
        %v795 = vsel %vm590, %v474, %v603
        %v796 = vsel %vm590, %v475, %v606
        %v797 = vsel %vm590, %v476, %v609
        %v798 = vsel %vm590, %v477, %v612
        %v799 = vsel %vm590, %v478, %v615
        %v800 = vsel %vm590, %v479, %v618
        %v801 = vsel %vm590, %v480, %v621
        %v802 = vsel %vm590, %v481, %v624
        %v803 = vsel %vm590, %v482, %v627
        %v804 = vsel %vm590, %v483, %v630
        %v805 = vsel %vm590, %v484, %v633
        %v806 = vsel %vm590, %v485, %v636
        %v807 = vsel %vm590, %v486, %v639
        %v808 = vsel %vm590, %v487, %v642
        %v809 = vsel %vm590, %v488, %v645
        %v810 = vsel %vm590, %v489, %v648
        %v811 = vsel %vm590, %v490, %v651
        %v812 = vsel %vm590, %v491, %v654
        %v813 = vsel %vm590, %v492, %v657
        %v814 = vsel %vm590, %v493, %v660
        %v815 = vsel %vm590, %v494, %v663
        %v816 = vsel %vm590, %v495, %v666
        %v817 = vsel %vm590, %v496, %v669
        %v818 = vsel %vm590, %v497, %v672
        %v819 = vsel %vm590, %v498, %v675
        %v820 = vsel %vm590, %v499, %v678
        %v821 = vsel %vm590, %v500, %v681
        %v822 = vsel %vm590, %v501, %v684
        %v823 = vsel %vm590, %v502, %v687
        %v824 = vsel %vm590, %v503, %v690
        %v825 = vsel %vm590, %v504, %v693
        %v826 = vsel %vm590, %v505, %v696
        %v827 = vsel %vm590, %v506, %v699
        %v828 = vsel %vm590, %v507, %v702
        %v829 = vsel %vm590, %v508, %v705
        %v830 = vsel %vm590, %v509, %v708
        %vm831 = vcmask 1046528
        %v832 = vrot.slane %v282, 1
        %v833 = vsel %vm831, %v470, %v832
        %v834 = vrot.slane %v284, 1
        %v835 = vsel %vm831, %v471, %v834
        %v836 = vrot.slane %v286, 1
        %v837 = vsel %vm831, %v472, %v836
        %v838 = vrot.slane %v288, 1
        %v839 = vsel %vm831, %v473, %v838
        %v840 = vrot.slane %v290, 1
        %v841 = vsel %vm831, %v474, %v840
        %v842 = vrot.slane %v292, 1
        %v843 = vsel %vm831, %v475, %v842
        %v844 = vrot.slane %v294, 1
        %v845 = vsel %vm831, %v476, %v844
        %v846 = vrot.slane %v296, 1
        %v847 = vsel %vm831, %v477, %v846
        %v848 = vrot.slane %v298, 1
        %v849 = vsel %vm831, %v478, %v848
        %v850 = vrot.slane %v300, 1
        %v851 = vsel %vm831, %v479, %v850
        %v852 = vrot.slane %v302, 1
        %v853 = vsel %vm831, %v480, %v852
        %v854 = vrot.slane %v304, 1
        %v855 = vsel %vm831, %v481, %v854
        %v856 = vrot.slane %v306, 1
        %v857 = vsel %vm831, %v482, %v856
        %v858 = vrot.slane %v308, 1
        %v859 = vsel %vm831, %v483, %v858
        %v860 = vrot.slane %v310, 1
        %v861 = vsel %vm831, %v484, %v860
        %v862 = vrot.slane %v312, 1
        %v863 = vsel %vm831, %v485, %v862
        %v864 = vrot.slane %v383, 1
        %v865 = vsel %vm831, %v486, %v864
        %v866 = vrot.slane %v385, 1
        %v867 = vsel %vm831, %v487, %v866
        %v868 = vrot.slane %v387, 1
        %v869 = vsel %vm831, %v488, %v868
        %v870 = vrot.slane %v389, 1
        %v871 = vsel %vm831, %v489, %v870
        %v872 = vrot.slane %v391, 1
        %v873 = vsel %vm831, %v490, %v872
        %v874 = vrot.slane %v393, 1
        %v875 = vsel %vm831, %v491, %v874
        %v876 = vrot.slane %v395, 1
        %v877 = vsel %vm831, %v492, %v876
        %v878 = vrot.slane %v397, 1
        %v879 = vsel %vm831, %v493, %v878
        %v880 = vrot.slane %v399, 1
        %v881 = vsel %vm831, %v494, %v880
        %v882 = vrot.slane %v401, 1
        %v883 = vsel %vm831, %v495, %v882
        %v884 = vrot.slane %v403, 1
        %v885 = vsel %vm831, %v496, %v884
        %v886 = vrot.slane %v405, 1
        %v887 = vsel %vm831, %v497, %v886
        %v888 = vrot.slane %v407, 1
        %v889 = vsel %vm831, %v498, %v888
        %v890 = vrot.slane %v409, 1
        %v891 = vsel %vm831, %v499, %v890
        %v892 = vrot.slane %v411, 1
        %v893 = vsel %vm831, %v500, %v892
        %v894 = vrot.slane %v413, 1
        %v895 = vsel %vm831, %v501, %v894
        %v896 = vrot.slane %v415, 1
        %v897 = vsel %vm831, %v502, %v896
        %v898 = vrot.slane %v417, 1
        %v899 = vsel %vm831, %v503, %v898
        %v900 = vrot.slane %v419, 1
        %v901 = vsel %vm831, %v504, %v900
        %v902 = vrot.slane %v421, 1
        %v903 = vsel %vm831, %v505, %v902
        %v904 = vrot.slane %v423, 1
        %v905 = vsel %vm831, %v506, %v904
        %v906 = vrot.slane %v425, 1
        %v907 = vsel %vm831, %v507, %v906
        %v908 = vrot.slane %v427, 1
        %v909 = vsel %vm831, %v508, %v908
        %v910 = vrot.slane %v429, 1
        %v911 = vsel %vm831, %v509, %v910
        %v1032 = vsel %vm831, %v832, %v592
        %v1033 = vsel %vm831, %v834, %v595
        %v1034 = vsel %vm831, %v836, %v598
        %v1035 = vsel %vm831, %v838, %v601
        %v1036 = vsel %vm831, %v840, %v604
        %v1037 = vsel %vm831, %v842, %v607
        %v1038 = vsel %vm831, %v844, %v610
        %v1039 = vsel %vm831, %v846, %v613
        %v1040 = vsel %vm831, %v848, %v616
        %v1041 = vsel %vm831, %v850, %v619
        %v1042 = vsel %vm831, %v852, %v622
        %v1043 = vsel %vm831, %v854, %v625
        %v1044 = vsel %vm831, %v856, %v628
        %v1045 = vsel %vm831, %v858, %v631
        %v1046 = vsel %vm831, %v860, %v634
        %v1047 = vsel %vm831, %v862, %v637
        %v1048 = vsel %vm831, %v864, %v640
        %v1049 = vsel %vm831, %v866, %v643
        %v1050 = vsel %vm831, %v868, %v646
        %v1051 = vsel %vm831, %v870, %v649
        %v1052 = vsel %vm831, %v872, %v652
        %v1053 = vsel %vm831, %v874, %v655
        %v1054 = vsel %vm831, %v876, %v658
        %v1055 = vsel %vm831, %v878, %v661
        %v1056 = vsel %vm831, %v880, %v664
        %v1057 = vsel %vm831, %v882, %v667
        %v1058 = vsel %vm831, %v884, %v670
        %v1059 = vsel %vm831, %v886, %v673
        %v1060 = vsel %vm831, %v888, %v676
        %v1061 = vsel %vm831, %v890, %v679
        %v1062 = vsel %vm831, %v892, %v682
        %v1063 = vsel %vm831, %v894, %v685
        %v1064 = vsel %vm831, %v896, %v688
        %v1065 = vsel %vm831, %v898, %v691
        %v1066 = vsel %vm831, %v900, %v694
        %v1067 = vsel %vm831, %v902, %v697
        %v1068 = vsel %vm831, %v904, %v700
        %v1069 = vsel %vm831, %v906, %v703
        %v1070 = vsel %vm831, %v908, %v706
        %v1071 = vsel %vm831, %v910, %v709
        %v1072 = vadd.f32 %v791, %v281
        %v1073 = vadd.f32 %v593, %v282
        %v1074 = vadd.f32 %v792, %v283
        %v1075 = vadd.f32 %v596, %v284
        %v1076 = vadd.f32 %v793, %v285
        %v1077 = vadd.f32 %v599, %v286
        %v1078 = vadd.f32 %v794, %v287
        %v1079 = vadd.f32 %v602, %v288
        %v1080 = vadd.f32 %v795, %v289
        %v1081 = vadd.f32 %v605, %v290
        %v1082 = vadd.f32 %v796, %v291
        %v1083 = vadd.f32 %v608, %v292
        %v1084 = vadd.f32 %v797, %v293
        %v1085 = vadd.f32 %v611, %v294
        %v1086 = vadd.f32 %v798, %v295
        %v1087 = vadd.f32 %v614, %v296
        %v1088 = vadd.f32 %v799, %v297
        %v1089 = vadd.f32 %v617, %v298
        %v1090 = vadd.f32 %v800, %v299
        %v1091 = vadd.f32 %v620, %v300
        %v1092 = vadd.f32 %v801, %v301
        %v1093 = vadd.f32 %v623, %v302
        %v1094 = vadd.f32 %v802, %v303
        %v1095 = vadd.f32 %v626, %v304
        %v1096 = vadd.f32 %v803, %v305
        %v1097 = vadd.f32 %v629, %v306
        %v1098 = vadd.f32 %v804, %v307
        %v1099 = vadd.f32 %v632, %v308
        %v1100 = vadd.f32 %v805, %v309
        %v1101 = vadd.f32 %v635, %v310
        %v1102 = vadd.f32 %v806, %v311
        %v1103 = vadd.f32 %v638, %v312
        %v1104 = vadd.f32 %v807, %v382
        %v1105 = vadd.f32 %v641, %v383
        %v1106 = vadd.f32 %v808, %v384
        %v1107 = vadd.f32 %v644, %v385
        %v1108 = vadd.f32 %v809, %v386
        %v1109 = vadd.f32 %v647, %v387
        %v1110 = vadd.f32 %v810, %v388
        %v1111 = vadd.f32 %v650, %v389
        %v1112 = vadd.f32 %v811, %v390
        %v1113 = vadd.f32 %v653, %v391
        %v1114 = vadd.f32 %v812, %v392
        %v1115 = vadd.f32 %v656, %v393
        %v1116 = vadd.f32 %v813, %v394
        %v1117 = vadd.f32 %v659, %v395
        %v1118 = vadd.f32 %v814, %v396
        %v1119 = vadd.f32 %v662, %v397
        %v1120 = vadd.f32 %v815, %v398
        %v1121 = vadd.f32 %v665, %v399
        %v1122 = vadd.f32 %v816, %v400
        %v1123 = vadd.f32 %v668, %v401
        %v1124 = vadd.f32 %v817, %v402
        %v1125 = vadd.f32 %v671, %v403
        %v1126 = vadd.f32 %v818, %v404
        %v1127 = vadd.f32 %v674, %v405
        %v1128 = vadd.f32 %v819, %v406
        %v1129 = vadd.f32 %v677, %v407
        %v1130 = vadd.f32 %v820, %v408
        %v1131 = vadd.f32 %v680, %v409
        %v1132 = vadd.f32 %v821, %v410
        %v1133 = vadd.f32 %v683, %v411
        %v1134 = vadd.f32 %v822, %v412
        %v1135 = vadd.f32 %v686, %v413
        %v1136 = vadd.f32 %v823, %v414
        %v1137 = vadd.f32 %v689, %v415
        %v1138 = vadd.f32 %v824, %v416
        %v1139 = vadd.f32 %v692, %v417
        %v1140 = vadd.f32 %v825, %v418
        %v1141 = vadd.f32 %v695, %v419
        %v1142 = vadd.f32 %v826, %v420
        %v1143 = vadd.f32 %v698, %v421
        %v1144 = vadd.f32 %v827, %v422
        %v1145 = vadd.f32 %v701, %v423
        %v1146 = vadd.f32 %v828, %v424
        %v1147 = vadd.f32 %v704, %v425
        %v1148 = vadd.f32 %v829, %v426
        %v1149 = vadd.f32 %v707, %v427
        %v1150 = vadd.f32 %v830, %v428
        %v1151 = vadd.f32 %v710, %v429
        %v1152 = vadd.f32 %v1072, %v833
        %v1153 = vadd.f32 %v1073, %v1032
        %v1154 = vadd.f32 %v1074, %v835
        %v1155 = vadd.f32 %v1075, %v1033
        %v1156 = vadd.f32 %v1076, %v837
        %v1157 = vadd.f32 %v1077, %v1034
        %v1158 = vadd.f32 %v1078, %v839
        %v1159 = vadd.f32 %v1079, %v1035
        %v1160 = vadd.f32 %v1080, %v841
        %v1161 = vadd.f32 %v1081, %v1036
        %v1162 = vadd.f32 %v1082, %v843
        %v1163 = vadd.f32 %v1083, %v1037
        %v1164 = vadd.f32 %v1084, %v845
        %v1165 = vadd.f32 %v1085, %v1038
        %v1166 = vadd.f32 %v1086, %v847
        %v1167 = vadd.f32 %v1087, %v1039
        %v1168 = vadd.f32 %v1088, %v849
        %v1169 = vadd.f32 %v1089, %v1040
        %v1170 = vadd.f32 %v1090, %v851
        %v1171 = vadd.f32 %v1091, %v1041
        %v1172 = vadd.f32 %v1092, %v853
        %v1173 = vadd.f32 %v1093, %v1042
        %v1174 = vadd.f32 %v1094, %v855
        %v1175 = vadd.f32 %v1095, %v1043
        %v1176 = vadd.f32 %v1096, %v857
        %v1177 = vadd.f32 %v1097, %v1044
        %v1178 = vadd.f32 %v1098, %v859
        %v1179 = vadd.f32 %v1099, %v1045
        %v1180 = vadd.f32 %v1100, %v861
        %v1181 = vadd.f32 %v1101, %v1046
        %v1182 = vadd.f32 %v1102, %v863
        %v1183 = vadd.f32 %v1103, %v1047
        %v1184 = vadd.f32 %v1104, %v865
        %v1185 = vadd.f32 %v1105, %v1048
        %v1186 = vadd.f32 %v1106, %v867
        %v1187 = vadd.f32 %v1107, %v1049
        %v1188 = vadd.f32 %v1108, %v869
        %v1189 = vadd.f32 %v1109, %v1050
        %v1190 = vadd.f32 %v1110, %v871
        %v1191 = vadd.f32 %v1111, %v1051
        %v1192 = vadd.f32 %v1112, %v873
        %v1193 = vadd.f32 %v1113, %v1052
        %v1194 = vadd.f32 %v1114, %v875
        %v1195 = vadd.f32 %v1115, %v1053
        %v1196 = vadd.f32 %v1116, %v877
        %v1197 = vadd.f32 %v1117, %v1054
        %v1198 = vadd.f32 %v1118, %v879
        %v1199 = vadd.f32 %v1119, %v1055
        %v1200 = vadd.f32 %v1120, %v881
        %v1201 = vadd.f32 %v1121, %v1056
        %v1202 = vadd.f32 %v1122, %v883
        %v1203 = vadd.f32 %v1123, %v1057
        %v1204 = vadd.f32 %v1124, %v885
        %v1205 = vadd.f32 %v1125, %v1058
        %v1206 = vadd.f32 %v1126, %v887
        %v1207 = vadd.f32 %v1127, %v1059
        %v1208 = vadd.f32 %v1128, %v889
        %v1209 = vadd.f32 %v1129, %v1060
        %v1210 = vadd.f32 %v1130, %v891
        %v1211 = vadd.f32 %v1131, %v1061
        %v1212 = vadd.f32 %v1132, %v893
        %v1213 = vadd.f32 %v1133, %v1062
        %v1214 = vadd.f32 %v1134, %v895
        %v1215 = vadd.f32 %v1135, %v1063
        %v1216 = vadd.f32 %v1136, %v897
        %v1217 = vadd.f32 %v1137, %v1064
        %v1218 = vadd.f32 %v1138, %v899
        %v1219 = vadd.f32 %v1139, %v1065
        %v1220 = vadd.f32 %v1140, %v901
        %v1221 = vadd.f32 %v1141, %v1066
        %v1222 = vadd.f32 %v1142, %v903
        %v1223 = vadd.f32 %v1143, %v1067
        %v1224 = vadd.f32 %v1144, %v905
        %v1225 = vadd.f32 %v1145, %v1068
        %v1226 = vadd.f32 %v1146, %v907
        %v1227 = vadd.f32 %v1147, %v1069
        %v1228 = vadd.f32 %v1148, %v909
        %v1229 = vadd.f32 %v1149, %v1070
        %v1230 = vadd.f32 %v1150, %v911
        %v1231 = vadd.f32 %v1151, %v1071
        %1312 = vrot.lane.b32.xlu0 %v1152, 127
        %v1313 = vpop.permute.xlu0 %1312
        %1314 = vrot.lane.b32.xlu0 %v1153, 127
        %v1315 = vpop.permute.xlu0 %1314
        %1316 = vrot.lane.b32.xlu0 %v1154, 127
        %v1317 = vpop.permute.xlu0 %1316
        %1318 = vrot.lane.b32.xlu0 %v1155, 127
        %v1319 = vpop.permute.xlu0 %1318
        %1320 = vrot.lane.b32.xlu0 %v1156, 127
        %v1321 = vpop.permute.xlu0 %1320
        %1322 = vrot.lane.b32.xlu0 %v1157, 127
        %v1323 = vpop.permute.xlu0 %1322
        %1324 = vrot.lane.b32.xlu0 %v1158, 127
        %v1325 = vpop.permute.xlu0 %1324
        %1326 = vrot.lane.b32.xlu0 %v1159, 127
        %v1327 = vpop.permute.xlu0 %1326
        %1328 = vrot.lane.b32.xlu0 %v1160, 127
        %v1329 = vpop.permute.xlu0 %1328
        %1330 = vrot.lane.b32.xlu0 %v1161, 127
        %v1331 = vpop.permute.xlu0 %1330
        %1332 = vrot.lane.b32.xlu0 %v1162, 127
        %v1333 = vpop.permute.xlu0 %1332
        %1334 = vrot.lane.b32.xlu0 %v1163, 127
        %v1335 = vpop.permute.xlu0 %1334
        %1336 = vrot.lane.b32.xlu0 %v1164, 127
        %v1337 = vpop.permute.xlu0 %1336
        %1338 = vrot.lane.b32.xlu0 %v1165, 127
        %v1339 = vpop.permute.xlu0 %1338
        %1340 = vrot.lane.b32.xlu0 %v1166, 127
        %v1341 = vpop.permute.xlu0 %1340
        %1342 = vrot.lane.b32.xlu0 %v1167, 127
        %v1343 = vpop.permute.xlu0 %1342
        %1344 = vrot.lane.b32.xlu0 %v1168, 127
        %v1345 = vpop.permute.xlu0 %1344
        %1346 = vrot.lane.b32.xlu0 %v1169, 127
        %v1347 = vpop.permute.xlu0 %1346
        %1348 = vrot.lane.b32.xlu0 %v1170, 127
        %v1349 = vpop.permute.xlu0 %1348
        %1350 = vrot.lane.b32.xlu0 %v1171, 127
        %v1351 = vpop.permute.xlu0 %1350
        %1352 = vrot.lane.b32.xlu0 %v1172, 127
        %v1353 = vpop.permute.xlu0 %1352
        %1354 = vrot.lane.b32.xlu0 %v1173, 127
        %v1355 = vpop.permute.xlu0 %1354
        %1356 = vrot.lane.b32.xlu0 %v1174, 127
        %v1357 = vpop.permute.xlu0 %1356
        %1358 = vrot.lane.b32.xlu0 %v1175, 127
        %v1359 = vpop.permute.xlu0 %1358
        %1360 = vrot.lane.b32.xlu0 %v1176, 127
        %v1361 = vpop.permute.xlu0 %1360
        %1362 = vrot.lane.b32.xlu0 %v1177, 127
        %v1363 = vpop.permute.xlu0 %1362
        %1364 = vrot.lane.b32.xlu0 %v1178, 127
        %v1365 = vpop.permute.xlu0 %1364
        %1366 = vrot.lane.b32.xlu0 %v1179, 127
        %v1367 = vpop.permute.xlu0 %1366
        %1368 = vrot.lane.b32.xlu0 %v1180, 127
        %v1369 = vpop.permute.xlu0 %1368
        %1370 = vrot.lane.b32.xlu0 %v1181, 127
        %v1371 = vpop.permute.xlu0 %1370
        %1372 = vrot.lane.b32.xlu0 %v1182, 127
        %v1373 = vpop.permute.xlu0 %1372
        %1374 = vrot.lane.b32.xlu0 %v1183, 127
        %v1375 = vpop.permute.xlu0 %1374
        %1376 = vrot.lane.b32.xlu0 %v1184, 127
        %v1377 = vpop.permute.xlu0 %1376
        %1378 = vrot.lane.b32.xlu0 %v1185, 127
        %v1379 = vpop.permute.xlu0 %1378
        %1380 = vrot.lane.b32.xlu0 %v1186, 127
        %v1381 = vpop.permute.xlu0 %1380
        %1382 = vrot.lane.b32.xlu0 %v1187, 127
        %v1383 = vpop.permute.xlu0 %1382
        %1384 = vrot.lane.b32.xlu0 %v1188, 127
        %v1385 = vpop.permute.xlu0 %1384
        %1386 = vrot.lane.b32.xlu0 %v1189, 127
        %v1387 = vpop.permute.xlu0 %1386
        %1388 = vrot.lane.b32.xlu0 %v1190, 127
        %v1389 = vpop.permute.xlu0 %1388
        %1390 = vrot.lane.b32.xlu0 %v1191, 127
        %v1391 = vpop.permute.xlu0 %1390
        %1392 = vrot.lane.b32.xlu0 %v1192, 127
        %v1393 = vpop.permute.xlu0 %1392
        %1394 = vrot.lane.b32.xlu0 %v1193, 127
        %v1395 = vpop.permute.xlu0 %1394
        %1396 = vrot.lane.b32.xlu0 %v1194, 127
        %v1397 = vpop.permute.xlu0 %1396
        %1398 = vrot.lane.b32.xlu0 %v1195, 127
        %v1399 = vpop.permute.xlu0 %1398
        %1400 = vrot.lane.b32.xlu0 %v1196, 127
        %v1401 = vpop.permute.xlu0 %1400
        %1402 = vrot.lane.b32.xlu0 %v1197, 127
        %v1403 = vpop.permute.xlu0 %1402
        %1404 = vrot.lane.b32.xlu0 %v1198, 127
        %v1405 = vpop.permute.xlu0 %1404
        %1406 = vrot.lane.b32.xlu0 %v1199, 127
        %v1407 = vpop.permute.xlu0 %1406
        %1408 = vrot.lane.b32.xlu0 %v1200, 127
        %v1409 = vpop.permute.xlu0 %1408
        %1410 = vrot.lane.b32.xlu0 %v1201, 127
        %v1411 = vpop.permute.xlu0 %1410
        %1412 = vrot.lane.b32.xlu0 %v1202, 127
        %v1413 = vpop.permute.xlu0 %1412
        %1414 = vrot.lane.b32.xlu0 %v1203, 127
        %v1415 = vpop.permute.xlu0 %1414
        %1416 = vrot.lane.b32.xlu0 %v1204, 127
        %v1417 = vpop.permute.xlu0 %1416
        %1418 = vrot.lane.b32.xlu0 %v1205, 127
        %v1419 = vpop.permute.xlu0 %1418
        %1420 = vrot.lane.b32.xlu0 %v1206, 127
        %v1421 = vpop.permute.xlu0 %1420
        %1422 = vrot.lane.b32.xlu0 %v1207, 127
        %v1423 = vpop.permute.xlu0 %1422
        %1424 = vrot.lane.b32.xlu0 %v1208, 127
        %v1425 = vpop.permute.xlu0 %1424
        %1426 = vrot.lane.b32.xlu0 %v1209, 127
        %v1427 = vpop.permute.xlu0 %1426
        %1428 = vrot.lane.b32.xlu0 %v1210, 127
        %v1429 = vpop.permute.xlu0 %1428
        %1430 = vrot.lane.b32.xlu0 %v1211, 127
        %v1431 = vpop.permute.xlu0 %1430
        %1432 = vrot.lane.b32.xlu0 %v1212, 127
        %v1433 = vpop.permute.xlu0 %1432
        %1434 = vrot.lane.b32.xlu0 %v1213, 127
        %v1435 = vpop.permute.xlu0 %1434
        %1436 = vrot.lane.b32.xlu0 %v1214, 127
        %v1437 = vpop.permute.xlu0 %1436
        %1438 = vrot.lane.b32.xlu0 %v1215, 127
        %v1439 = vpop.permute.xlu0 %1438
        %1440 = vrot.lane.b32.xlu0 %v1216, 127
        %v1441 = vpop.permute.xlu0 %1440
        %1442 = vrot.lane.b32.xlu0 %v1217, 127
        %v1443 = vpop.permute.xlu0 %1442
        %1444 = vrot.lane.b32.xlu0 %v1218, 127
        %v1445 = vpop.permute.xlu0 %1444
        %1446 = vrot.lane.b32.xlu0 %v1219, 127
        %v1447 = vpop.permute.xlu0 %1446
        %1448 = vrot.lane.b32.xlu0 %v1220, 127
        %v1449 = vpop.permute.xlu0 %1448
        %1450 = vrot.lane.b32.xlu0 %v1221, 127
        %v1451 = vpop.permute.xlu0 %1450
        %1452 = vrot.lane.b32.xlu0 %v1222, 127
        %v1453 = vpop.permute.xlu0 %1452
        %1454 = vrot.lane.b32.xlu0 %v1223, 127
        %v1455 = vpop.permute.xlu0 %1454
        %1456 = vrot.lane.b32.xlu0 %v1224, 127
        %v1457 = vpop.permute.xlu0 %1456
        %1458 = vrot.lane.b32.xlu0 %v1225, 127
        %v1459 = vpop.permute.xlu0 %1458
        %1460 = vrot.lane.b32.xlu0 %v1226, 127
        %v1461 = vpop.permute.xlu0 %1460
        %1462 = vrot.lane.b32.xlu0 %v1227, 127
        %v1463 = vpop.permute.xlu0 %1462
        %1464 = vrot.lane.b32.xlu0 %v1228, 127
        %v1465 = vpop.permute.xlu0 %1464
        %1466 = vrot.lane.b32.xlu0 %v1229, 127
        %v1467 = vpop.permute.xlu0 %1466
        %1468 = vrot.lane.b32.xlu0 %v1230, 127
        %v1469 = vpop.permute.xlu0 %1468
        %1470 = vrot.lane.b32.xlu0 %v1231, 127
        %v1471 = vpop.permute.xlu0 %1470
        %1552 = vrot.lane.b32.xlu0 %v1152, 1
        %v1553 = vpop.permute.xlu0 %1552
        %1554 = vrot.lane.b32.xlu0 %v1153, 1
        %v1555 = vpop.permute.xlu0 %1554
        %1556 = vrot.lane.b32.xlu0 %v1154, 1
        %v1557 = vpop.permute.xlu0 %1556
        %1558 = vrot.lane.b32.xlu0 %v1155, 1
        %v1559 = vpop.permute.xlu0 %1558
        %1560 = vrot.lane.b32.xlu0 %v1156, 1
        %v1561 = vpop.permute.xlu0 %1560
        %1562 = vrot.lane.b32.xlu0 %v1157, 1
        %v1563 = vpop.permute.xlu0 %1562
        %1564 = vrot.lane.b32.xlu0 %v1158, 1
        %v1565 = vpop.permute.xlu0 %1564
        %1566 = vrot.lane.b32.xlu0 %v1159, 1
        %v1567 = vpop.permute.xlu0 %1566
        %1568 = vrot.lane.b32.xlu0 %v1160, 1
        %v1569 = vpop.permute.xlu0 %1568
        %1570 = vrot.lane.b32.xlu0 %v1161, 1
        %v1571 = vpop.permute.xlu0 %1570
        %1572 = vrot.lane.b32.xlu0 %v1162, 1
        %v1573 = vpop.permute.xlu0 %1572
        %1574 = vrot.lane.b32.xlu0 %v1163, 1
        %v1575 = vpop.permute.xlu0 %1574
        %1576 = vrot.lane.b32.xlu0 %v1164, 1
        %v1577 = vpop.permute.xlu0 %1576
        %1578 = vrot.lane.b32.xlu0 %v1165, 1
        %v1579 = vpop.permute.xlu0 %1578
        %1580 = vrot.lane.b32.xlu0 %v1166, 1
        %v1581 = vpop.permute.xlu0 %1580
        %1582 = vrot.lane.b32.xlu0 %v1167, 1
        %v1583 = vpop.permute.xlu0 %1582
        %1584 = vrot.lane.b32.xlu0 %v1168, 1
        %v1585 = vpop.permute.xlu0 %1584
        %1586 = vrot.lane.b32.xlu0 %v1169, 1
        %v1587 = vpop.permute.xlu0 %1586
        %1588 = vrot.lane.b32.xlu0 %v1170, 1
        %v1589 = vpop.permute.xlu0 %1588
        %1590 = vrot.lane.b32.xlu0 %v1171, 1
        %v1591 = vpop.permute.xlu0 %1590
        %1592 = vrot.lane.b32.xlu0 %v1172, 1
        %v1593 = vpop.permute.xlu0 %1592
        %1594 = vrot.lane.b32.xlu0 %v1173, 1
        %v1595 = vpop.permute.xlu0 %1594
        %1596 = vrot.lane.b32.xlu0 %v1174, 1
        %v1597 = vpop.permute.xlu0 %1596
        %1598 = vrot.lane.b32.xlu0 %v1175, 1
        %v1599 = vpop.permute.xlu0 %1598
        %1600 = vrot.lane.b32.xlu0 %v1176, 1
        %v1601 = vpop.permute.xlu0 %1600
        %1602 = vrot.lane.b32.xlu0 %v1177, 1
        %v1603 = vpop.permute.xlu0 %1602
        %1604 = vrot.lane.b32.xlu0 %v1178, 1
        %v1605 = vpop.permute.xlu0 %1604
        %1606 = vrot.lane.b32.xlu0 %v1179, 1
        %v1607 = vpop.permute.xlu0 %1606
        %1608 = vrot.lane.b32.xlu0 %v1180, 1
        %v1609 = vpop.permute.xlu0 %1608
        %1610 = vrot.lane.b32.xlu0 %v1181, 1
        %v1611 = vpop.permute.xlu0 %1610
        %1612 = vrot.lane.b32.xlu0 %v1182, 1
        %v1613 = vpop.permute.xlu0 %1612
        %1614 = vrot.lane.b32.xlu0 %v1183, 1
        %v1615 = vpop.permute.xlu0 %1614
        %1616 = vrot.lane.b32.xlu0 %v1184, 1
        %v1617 = vpop.permute.xlu0 %1616
        %1618 = vrot.lane.b32.xlu0 %v1185, 1
        %v1619 = vpop.permute.xlu0 %1618
        %1620 = vrot.lane.b32.xlu0 %v1186, 1
        %v1621 = vpop.permute.xlu0 %1620
        %1622 = vrot.lane.b32.xlu0 %v1187, 1
        %v1623 = vpop.permute.xlu0 %1622
        %1624 = vrot.lane.b32.xlu0 %v1188, 1
        %v1625 = vpop.permute.xlu0 %1624
        %1626 = vrot.lane.b32.xlu0 %v1189, 1
        %v1627 = vpop.permute.xlu0 %1626
        %1628 = vrot.lane.b32.xlu0 %v1190, 1
        %v1629 = vpop.permute.xlu0 %1628
        %1630 = vrot.lane.b32.xlu0 %v1191, 1
        %v1631 = vpop.permute.xlu0 %1630
        %1632 = vrot.lane.b32.xlu0 %v1192, 1
        %v1633 = vpop.permute.xlu0 %1632
        %1634 = vrot.lane.b32.xlu0 %v1193, 1
        %v1635 = vpop.permute.xlu0 %1634
        %1636 = vrot.lane.b32.xlu0 %v1194, 1
        %v1637 = vpop.permute.xlu0 %1636
        %1638 = vrot.lane.b32.xlu0 %v1195, 1
        %v1639 = vpop.permute.xlu0 %1638
        %1640 = vrot.lane.b32.xlu0 %v1196, 1
        %v1641 = vpop.permute.xlu0 %1640
        %1642 = vrot.lane.b32.xlu0 %v1197, 1
        %v1643 = vpop.permute.xlu0 %1642
        %1644 = vrot.lane.b32.xlu0 %v1198, 1
        %v1645 = vpop.permute.xlu0 %1644
        %1646 = vrot.lane.b32.xlu0 %v1199, 1
        %v1647 = vpop.permute.xlu0 %1646
        %1648 = vrot.lane.b32.xlu0 %v1200, 1
        %v1649 = vpop.permute.xlu0 %1648
        %1650 = vrot.lane.b32.xlu0 %v1201, 1
        %v1651 = vpop.permute.xlu0 %1650
        %1652 = vrot.lane.b32.xlu0 %v1202, 1
        %v1653 = vpop.permute.xlu0 %1652
        %1654 = vrot.lane.b32.xlu0 %v1203, 1
        %v1655 = vpop.permute.xlu0 %1654
        %1656 = vrot.lane.b32.xlu0 %v1204, 1
        %v1657 = vpop.permute.xlu0 %1656
        %1658 = vrot.lane.b32.xlu0 %v1205, 1
        %v1659 = vpop.permute.xlu0 %1658
        %1660 = vrot.lane.b32.xlu0 %v1206, 1
        %v1661 = vpop.permute.xlu0 %1660
        %1662 = vrot.lane.b32.xlu0 %v1207, 1
        %v1663 = vpop.permute.xlu0 %1662
        %1664 = vrot.lane.b32.xlu0 %v1208, 1
        %v1665 = vpop.permute.xlu0 %1664
        %1666 = vrot.lane.b32.xlu0 %v1209, 1
        %v1667 = vpop.permute.xlu0 %1666
        %1668 = vrot.lane.b32.xlu0 %v1210, 1
        %v1669 = vpop.permute.xlu0 %1668
        %1670 = vrot.lane.b32.xlu0 %v1211, 1
        %v1671 = vpop.permute.xlu0 %1670
        %1672 = vrot.lane.b32.xlu0 %v1212, 1
        %v1673 = vpop.permute.xlu0 %1672
        %1674 = vrot.lane.b32.xlu0 %v1213, 1
        %v1675 = vpop.permute.xlu0 %1674
        %1676 = vrot.lane.b32.xlu0 %v1214, 1
        %v1677 = vpop.permute.xlu0 %1676
        %1678 = vrot.lane.b32.xlu0 %v1215, 1
        %v1679 = vpop.permute.xlu0 %1678
        %1680 = vrot.lane.b32.xlu0 %v1216, 1
        %v1681 = vpop.permute.xlu0 %1680
        %1682 = vrot.lane.b32.xlu0 %v1217, 1
        %v1683 = vpop.permute.xlu0 %1682
        %1684 = vrot.lane.b32.xlu0 %v1218, 1
        %v1685 = vpop.permute.xlu0 %1684
        %1686 = vrot.lane.b32.xlu0 %v1219, 1
        %v1687 = vpop.permute.xlu0 %1686
        %1688 = vrot.lane.b32.xlu0 %v1220, 1
        %v1689 = vpop.permute.xlu0 %1688
        %1690 = vrot.lane.b32.xlu0 %v1221, 1
        %v1691 = vpop.permute.xlu0 %1690
        %1692 = vrot.lane.b32.xlu0 %v1222, 1
        %v1693 = vpop.permute.xlu0 %1692
        %1694 = vrot.lane.b32.xlu0 %v1223, 1
        %v1695 = vpop.permute.xlu0 %1694
        %1696 = vrot.lane.b32.xlu0 %v1224, 1
        %v1697 = vpop.permute.xlu0 %1696
        %1698 = vrot.lane.b32.xlu0 %v1225, 1
        %v1699 = vpop.permute.xlu0 %1698
        %1700 = vrot.lane.b32.xlu0 %v1226, 1
        %v1701 = vpop.permute.xlu0 %1700
        %1702 = vrot.lane.b32.xlu0 %v1227, 1
        %v1703 = vpop.permute.xlu0 %1702
        %1704 = vrot.lane.b32.xlu0 %v1228, 1
        %v1705 = vpop.permute.xlu0 %1704
        %1706 = vrot.lane.b32.xlu0 %v1229, 1
        %v1707 = vpop.permute.xlu0 %1706
        %1708 = vrot.lane.b32.xlu0 %v1230, 1
        %v1709 = vpop.permute.xlu0 %1708
        %1710 = vrot.lane.b32.xlu0 %v1231, 1
        %v1711 = vpop.permute.xlu0 %1710
        %vm1792 = vcmask 7168
        %v1793 = vsel %vm1792, %v1313, %v1553
        %v1794 = vsel %vm1792, %v1315, %v1555
        %v1795 = vsel %vm1792, %v1317, %v1557
        %v1796 = vsel %vm1792, %v1319, %v1559
        %v1797 = vsel %vm1792, %v1321, %v1561
        %v1798 = vsel %vm1792, %v1323, %v1563
        %v1799 = vsel %vm1792, %v1325, %v1565
        %v1800 = vsel %vm1792, %v1327, %v1567
        %v1801 = vsel %vm1792, %v1329, %v1569
        %v1802 = vsel %vm1792, %v1331, %v1571
        %v1803 = vsel %vm1792, %v1333, %v1573
        %v1804 = vsel %vm1792, %v1335, %v1575
        %v1805 = vsel %vm1792, %v1337, %v1577
        %v1806 = vsel %vm1792, %v1339, %v1579
        %v1807 = vsel %vm1792, %v1341, %v1581
        %v1808 = vsel %vm1792, %v1343, %v1583
        %v1809 = vsel %vm1792, %v1345, %v1585
        %v1810 = vsel %vm1792, %v1347, %v1587
        %v1811 = vsel %vm1792, %v1349, %v1589
        %v1812 = vsel %vm1792, %v1351, %v1591
        %v1813 = vsel %vm1792, %v1353, %v1593
        %v1814 = vsel %vm1792, %v1355, %v1595
        %v1815 = vsel %vm1792, %v1357, %v1597
        %v1816 = vsel %vm1792, %v1359, %v1599
        %v1817 = vsel %vm1792, %v1361, %v1601
        %v1818 = vsel %vm1792, %v1363, %v1603
        %v1819 = vsel %vm1792, %v1365, %v1605
        %v1820 = vsel %vm1792, %v1367, %v1607
        %v1821 = vsel %vm1792, %v1369, %v1609
        %v1822 = vsel %vm1792, %v1371, %v1611
        %v1823 = vsel %vm1792, %v1373, %v1613
        %v1824 = vsel %vm1792, %v1375, %v1615
        %v1825 = vsel %vm1792, %v1377, %v1617
        %v1826 = vsel %vm1792, %v1379, %v1619
        %v1827 = vsel %vm1792, %v1381, %v1621
        %v1828 = vsel %vm1792, %v1383, %v1623
        %v1829 = vsel %vm1792, %v1385, %v1625
        %v1830 = vsel %vm1792, %v1387, %v1627
        %v1831 = vsel %vm1792, %v1389, %v1629
        %v1832 = vsel %vm1792, %v1391, %v1631
        %v1833 = vsel %vm1792, %v1393, %v1633
        %v1834 = vsel %vm1792, %v1395, %v1635
        %v1835 = vsel %vm1792, %v1397, %v1637
        %v1836 = vsel %vm1792, %v1399, %v1639
        %v1837 = vsel %vm1792, %v1401, %v1641
        %v1838 = vsel %vm1792, %v1403, %v1643
        %v1839 = vsel %vm1792, %v1405, %v1645
        %v1840 = vsel %vm1792, %v1407, %v1647
        %v1841 = vsel %vm1792, %v1409, %v1649
        %v1842 = vsel %vm1792, %v1411, %v1651
        %v1843 = vsel %vm1792, %v1413, %v1653
        %v1844 = vsel %vm1792, %v1415, %v1655
        %v1845 = vsel %vm1792, %v1417, %v1657
        %v1846 = vsel %vm1792, %v1419, %v1659
        %v1847 = vsel %vm1792, %v1421, %v1661
        %v1848 = vsel %vm1792, %v1423, %v1663
        %v1849 = vsel %vm1792, %v1425, %v1665
        %v1850 = vsel %vm1792, %v1427, %v1667
        %v1851 = vsel %vm1792, %v1429, %v1669
        %v1852 = vsel %vm1792, %v1431, %v1671
        %v1853 = vsel %vm1792, %v1433, %v1673
        %v1854 = vsel %vm1792, %v1435, %v1675
        %v1855 = vsel %vm1792, %v1437, %v1677
        %v1856 = vsel %vm1792, %v1439, %v1679
        %v1857 = vsel %vm1792, %v1441, %v1681
        %v1858 = vsel %vm1792, %v1443, %v1683
        %v1859 = vsel %vm1792, %v1445, %v1685
        %v1860 = vsel %vm1792, %v1447, %v1687
        %v1861 = vsel %vm1792, %v1449, %v1689
        %v1862 = vsel %vm1792, %v1451, %v1691
        %v1863 = vsel %vm1792, %v1453, %v1693
        %v1864 = vsel %vm1792, %v1455, %v1695
        %v1865 = vsel %vm1792, %v1457, %v1697
        %v1866 = vsel %vm1792, %v1459, %v1699
        %v1867 = vsel %vm1792, %v1461, %v1701
        %v1868 = vsel %vm1792, %v1463, %v1703
        %v1869 = vsel %vm1792, %v1465, %v1705
        %v1870 = vsel %vm1792, %v1467, %v1707
        %v1871 = vsel %vm1792, %v1469, %v1709
        %v1872 = vsel %vm1792, %v1471, %v1711
        %vm1873 = vcmask 121856
        %v1874 = vsel %vm1873, %v1313, %v1553
        %v1875 = vsel %vm1873, %v1315, %v1555
        %v1876 = vsel %vm1873, %v1317, %v1557
        %v1877 = vsel %vm1873, %v1319, %v1559
        %v1878 = vsel %vm1873, %v1321, %v1561
        %v1879 = vsel %vm1873, %v1323, %v1563
        %v1880 = vsel %vm1873, %v1325, %v1565
        %v1881 = vsel %vm1873, %v1327, %v1567
        %v1882 = vsel %vm1873, %v1329, %v1569
        %v1883 = vsel %vm1873, %v1331, %v1571
        %v1884 = vsel %vm1873, %v1333, %v1573
        %v1885 = vsel %vm1873, %v1335, %v1575
        %v1886 = vsel %vm1873, %v1337, %v1577
        %v1887 = vsel %vm1873, %v1339, %v1579
        %v1888 = vsel %vm1873, %v1341, %v1581
        %v1889 = vsel %vm1873, %v1343, %v1583
        %v1890 = vsel %vm1873, %v1345, %v1585
        %v1891 = vsel %vm1873, %v1347, %v1587
        %v1892 = vsel %vm1873, %v1349, %v1589
        %v1893 = vsel %vm1873, %v1351, %v1591
        %v1894 = vsel %vm1873, %v1353, %v1593
        %v1895 = vsel %vm1873, %v1355, %v1595
        %v1896 = vsel %vm1873, %v1357, %v1597
        %v1897 = vsel %vm1873, %v1359, %v1599
        %v1898 = vsel %vm1873, %v1361, %v1601
        %v1899 = vsel %vm1873, %v1363, %v1603
        %v1900 = vsel %vm1873, %v1365, %v1605
        %v1901 = vsel %vm1873, %v1367, %v1607
        %v1902 = vsel %vm1873, %v1369, %v1609
        %v1903 = vsel %vm1873, %v1371, %v1611
        %v1904 = vsel %vm1873, %v1373, %v1613
        %v1905 = vsel %vm1873, %v1375, %v1615
        %v1906 = vsel %vm1873, %v1377, %v1617
        %v1907 = vsel %vm1873, %v1379, %v1619
        %v1908 = vsel %vm1873, %v1381, %v1621
        %v1909 = vsel %vm1873, %v1383, %v1623
        %v1910 = vsel %vm1873, %v1385, %v1625
        %v1911 = vsel %vm1873, %v1387, %v1627
        %v1912 = vsel %vm1873, %v1389, %v1629
        %v1913 = vsel %vm1873, %v1391, %v1631
        %v1914 = vsel %vm1873, %v1393, %v1633
        %v1915 = vsel %vm1873, %v1395, %v1635
        %v1916 = vsel %vm1873, %v1397, %v1637
        %v1917 = vsel %vm1873, %v1399, %v1639
        %v1918 = vsel %vm1873, %v1401, %v1641
        %v1919 = vsel %vm1873, %v1403, %v1643
        %v1920 = vsel %vm1873, %v1405, %v1645
        %v1921 = vsel %vm1873, %v1407, %v1647
        %v1922 = vsel %vm1873, %v1409, %v1649
        %v1923 = vsel %vm1873, %v1411, %v1651
        %v1924 = vsel %vm1873, %v1413, %v1653
        %v1925 = vsel %vm1873, %v1415, %v1655
        %v1926 = vsel %vm1873, %v1417, %v1657
        %v1927 = vsel %vm1873, %v1419, %v1659
        %v1928 = vsel %vm1873, %v1421, %v1661
        %v1929 = vsel %vm1873, %v1423, %v1663
        %v1930 = vsel %vm1873, %v1425, %v1665
        %v1931 = vsel %vm1873, %v1427, %v1667
        %v1932 = vsel %vm1873, %v1429, %v1669
        %v1933 = vsel %vm1873, %v1431, %v1671
        %v1934 = vsel %vm1873, %v1433, %v1673
        %v1935 = vsel %vm1873, %v1435, %v1675
        %v1936 = vsel %vm1873, %v1437, %v1677
        %v1937 = vsel %vm1873, %v1439, %v1679
        %v1938 = vsel %vm1873, %v1441, %v1681
        %v1939 = vsel %vm1873, %v1443, %v1683
        %v1940 = vsel %vm1873, %v1445, %v1685
        %v1941 = vsel %vm1873, %v1447, %v1687
        %v1942 = vsel %vm1873, %v1449, %v1689
        %v1943 = vsel %vm1873, %v1451, %v1691
        %v1944 = vsel %vm1873, %v1453, %v1693
        %v1945 = vsel %vm1873, %v1455, %v1695
        %v1946 = vsel %vm1873, %v1457, %v1697
        %v1947 = vsel %vm1873, %v1459, %v1699
        %v1948 = vsel %vm1873, %v1461, %v1701
        %v1949 = vsel %vm1873, %v1463, %v1703
        %v1950 = vsel %vm1873, %v1465, %v1705
        %v1951 = vsel %vm1873, %v1467, %v1707
        %v1952 = vsel %vm1873, %v1469, %v1709
        %v1953 = vsel %vm1873, %v1471, %v1711
        %v1954 = vadd.f32 %v1793, %v1152
        %v1955 = vadd.f32 %v1794, %v1153
        %v1956 = vadd.f32 %v1795, %v1154
        %v1957 = vadd.f32 %v1796, %v1155
        %v1958 = vadd.f32 %v1797, %v1156
        %v1959 = vadd.f32 %v1798, %v1157
        %v1960 = vadd.f32 %v1799, %v1158
        %v1961 = vadd.f32 %v1800, %v1159
        %v1962 = vadd.f32 %v1801, %v1160
        %v1963 = vadd.f32 %v1802, %v1161
        %v1964 = vadd.f32 %v1803, %v1162
        %v1965 = vadd.f32 %v1804, %v1163
        %v1966 = vadd.f32 %v1805, %v1164
        %v1967 = vadd.f32 %v1806, %v1165
        %v1968 = vadd.f32 %v1807, %v1166
        %v1969 = vadd.f32 %v1808, %v1167
        %v1970 = vadd.f32 %v1809, %v1168
        %v1971 = vadd.f32 %v1810, %v1169
        %v1972 = vadd.f32 %v1811, %v1170
        %v1973 = vadd.f32 %v1812, %v1171
        %v1974 = vadd.f32 %v1813, %v1172
        %v1975 = vadd.f32 %v1814, %v1173
        %v1976 = vadd.f32 %v1815, %v1174
        %v1977 = vadd.f32 %v1816, %v1175
        %v1978 = vadd.f32 %v1817, %v1176
        %v1979 = vadd.f32 %v1818, %v1177
        %v1980 = vadd.f32 %v1819, %v1178
        %v1981 = vadd.f32 %v1820, %v1179
        %v1982 = vadd.f32 %v1821, %v1180
        %v1983 = vadd.f32 %v1822, %v1181
        %v1984 = vadd.f32 %v1823, %v1182
        %v1985 = vadd.f32 %v1824, %v1183
        %v1986 = vadd.f32 %v1825, %v1184
        %v1987 = vadd.f32 %v1826, %v1185
        %v1988 = vadd.f32 %v1827, %v1186
        %v1989 = vadd.f32 %v1828, %v1187
        %v1990 = vadd.f32 %v1829, %v1188
        %v1991 = vadd.f32 %v1830, %v1189
        %v1992 = vadd.f32 %v1831, %v1190
        %v1993 = vadd.f32 %v1832, %v1191
        %v1994 = vadd.f32 %v1833, %v1192
        %v1995 = vadd.f32 %v1834, %v1193
        %v1996 = vadd.f32 %v1835, %v1194
        %v1997 = vadd.f32 %v1836, %v1195
        %v1998 = vadd.f32 %v1837, %v1196
        %v1999 = vadd.f32 %v1838, %v1197
        %v2000 = vadd.f32 %v1839, %v1198
        %v2001 = vadd.f32 %v1840, %v1199
        %v2002 = vadd.f32 %v1841, %v1200
        %v2003 = vadd.f32 %v1842, %v1201
        %v2004 = vadd.f32 %v1843, %v1202
        %v2005 = vadd.f32 %v1844, %v1203
        %v2006 = vadd.f32 %v1845, %v1204
        %v2007 = vadd.f32 %v1846, %v1205
        %v2008 = vadd.f32 %v1847, %v1206
        %v2009 = vadd.f32 %v1848, %v1207
        %v2010 = vadd.f32 %v1849, %v1208
        %v2011 = vadd.f32 %v1850, %v1209
        %v2012 = vadd.f32 %v1851, %v1210
        %v2013 = vadd.f32 %v1852, %v1211
        %v2014 = vadd.f32 %v1853, %v1212
        %v2015 = vadd.f32 %v1854, %v1213
        %v2016 = vadd.f32 %v1855, %v1214
        %v2017 = vadd.f32 %v1856, %v1215
        %v2018 = vadd.f32 %v1857, %v1216
        %v2019 = vadd.f32 %v1858, %v1217
        %v2020 = vadd.f32 %v1859, %v1218
        %v2021 = vadd.f32 %v1860, %v1219
        %v2022 = vadd.f32 %v1861, %v1220
        %v2023 = vadd.f32 %v1862, %v1221
        %v2024 = vadd.f32 %v1863, %v1222
        %v2025 = vadd.f32 %v1864, %v1223
        %v2026 = vadd.f32 %v1865, %v1224
        %v2027 = vadd.f32 %v1866, %v1225
        %v2028 = vadd.f32 %v1867, %v1226
        %v2029 = vadd.f32 %v1868, %v1227
        %v2030 = vadd.f32 %v1869, %v1228
        %v2031 = vadd.f32 %v1870, %v1229
        %v2032 = vadd.f32 %v1871, %v1230
        %v2033 = vadd.f32 %v1872, %v1231
        %v2034 = vadd.f32 %v1954, %v1874
        %v2035 = vadd.f32 %v1955, %v1875
        %v2036 = vadd.f32 %v1956, %v1876
        %v2037 = vadd.f32 %v1957, %v1877
        %v2038 = vadd.f32 %v1958, %v1878
        %v2039 = vadd.f32 %v1959, %v1879
        %v2040 = vadd.f32 %v1960, %v1880
        %v2041 = vadd.f32 %v1961, %v1881
        %v2042 = vadd.f32 %v1962, %v1882
        %v2043 = vadd.f32 %v1963, %v1883
        %v2044 = vadd.f32 %v1964, %v1884
        %v2045 = vadd.f32 %v1965, %v1885
        %v2046 = vadd.f32 %v1966, %v1886
        %v2047 = vadd.f32 %v1967, %v1887
        %v2048 = vadd.f32 %v1968, %v1888
        %v2049 = vadd.f32 %v1969, %v1889
        %v2050 = vadd.f32 %v1970, %v1890
        %v2051 = vadd.f32 %v1971, %v1891
        %v2052 = vadd.f32 %v1972, %v1892
        %v2053 = vadd.f32 %v1973, %v1893
        %v2054 = vadd.f32 %v1974, %v1894
        %v2055 = vadd.f32 %v1975, %v1895
        %v2056 = vadd.f32 %v1976, %v1896
        %v2057 = vadd.f32 %v1977, %v1897
        %v2058 = vadd.f32 %v1978, %v1898
        %v2059 = vadd.f32 %v1979, %v1899
        %v2060 = vadd.f32 %v1980, %v1900
        %v2061 = vadd.f32 %v1981, %v1901
        %v2062 = vadd.f32 %v1982, %v1902
        %v2063 = vadd.f32 %v1983, %v1903
        %v2064 = vadd.f32 %v1984, %v1904
        %v2065 = vadd.f32 %v1985, %v1905
        %v2066 = vadd.f32 %v1986, %v1906
        %v2067 = vadd.f32 %v1987, %v1907
        %v2068 = vadd.f32 %v1988, %v1908
        %v2069 = vadd.f32 %v1989, %v1909
        %v2070 = vadd.f32 %v1990, %v1910
        %v2071 = vadd.f32 %v1991, %v1911
        %v2072 = vadd.f32 %v1992, %v1912
        %v2073 = vadd.f32 %v1993, %v1913
        %v2074 = vadd.f32 %v1994, %v1914
        %v2075 = vadd.f32 %v1995, %v1915
        %v2076 = vadd.f32 %v1996, %v1916
        %v2077 = vadd.f32 %v1997, %v1917
        %v2078 = vadd.f32 %v1998, %v1918
        %v2079 = vadd.f32 %v1999, %v1919
        %v2080 = vadd.f32 %v2000, %v1920
        %v2081 = vadd.f32 %v2001, %v1921
        %v2082 = vadd.f32 %v2002, %v1922
        %v2083 = vadd.f32 %v2003, %v1923
        %v2084 = vadd.f32 %v2004, %v1924
        %v2085 = vadd.f32 %v2005, %v1925
        %v2086 = vadd.f32 %v2006, %v1926
        %v2087 = vadd.f32 %v2007, %v1927
        %v2088 = vadd.f32 %v2008, %v1928
        %v2089 = vadd.f32 %v2009, %v1929
        %v2090 = vadd.f32 %v2010, %v1930
        %v2091 = vadd.f32 %v2011, %v1931
        %v2092 = vadd.f32 %v2012, %v1932
        %v2093 = vadd.f32 %v2013, %v1933
        %v2094 = vadd.f32 %v2014, %v1934
        %v2095 = vadd.f32 %v2015, %v1935
        %v2096 = vadd.f32 %v2016, %v1936
        %v2097 = vadd.f32 %v2017, %v1937
        %v2098 = vadd.f32 %v2018, %v1938
        %v2099 = vadd.f32 %v2019, %v1939
        %v2100 = vadd.f32 %v2020, %v1940
        %v2101 = vadd.f32 %v2021, %v1941
        %v2102 = vadd.f32 %v2022, %v1942
        %v2103 = vadd.f32 %v2023, %v1943
        %v2104 = vadd.f32 %v2024, %v1944
        %v2105 = vadd.f32 %v2025, %v1945
        %v2106 = vadd.f32 %v2026, %v1946
        %v2107 = vadd.f32 %v2027, %v1947
        %v2108 = vadd.f32 %v2028, %v1948
        %v2109 = vadd.f32 %v2029, %v1949
        %v2110 = vadd.f32 %v2030, %v1950
        %v2111 = vadd.f32 %v2031, %v1951
        %v2112 = vadd.f32 %v2032, %v1952
        %v2113 = vadd.f32 %v2033, %v1953
        %v2114 = vmul.f32 %v2034, 0.11111111
        %v2115 = vmul.f32 %v2035, 0.11111111
        %v2116 = vmul.f32 %v2036, 0.11111111
        %v2117 = vmul.f32 %v2037, 0.11111111
        %v2118 = vmul.f32 %v2038, 0.11111111
        %v2119 = vmul.f32 %v2039, 0.11111111
        %v2120 = vmul.f32 %v2040, 0.11111111
        %v2121 = vmul.f32 %v2041, 0.11111111
        %v2122 = vmul.f32 %v2042, 0.11111111
        %v2123 = vmul.f32 %v2043, 0.11111111
        %v2124 = vmul.f32 %v2044, 0.11111111
        %v2125 = vmul.f32 %v2045, 0.11111111
        %v2126 = vmul.f32 %v2046, 0.11111111
        %v2127 = vmul.f32 %v2047, 0.11111111
        %v2128 = vmul.f32 %v2048, 0.11111111
        %v2129 = vmul.f32 %v2049, 0.11111111
        %v2130 = vmul.f32 %v2050, 0.11111111
        %v2131 = vmul.f32 %v2051, 0.11111111
        %v2132 = vmul.f32 %v2052, 0.11111111
        %v2133 = vmul.f32 %v2053, 0.11111111
        %v2134 = vmul.f32 %v2054, 0.11111111
        %v2135 = vmul.f32 %v2055, 0.11111111
        %v2136 = vmul.f32 %v2056, 0.11111111
        %v2137 = vmul.f32 %v2057, 0.11111111
        %v2138 = vmul.f32 %v2058, 0.11111111
        %v2139 = vmul.f32 %v2059, 0.11111111
        %v2140 = vmul.f32 %v2060, 0.11111111
        %v2141 = vmul.f32 %v2061, 0.11111111
        %v2142 = vmul.f32 %v2062, 0.11111111
        %v2143 = vmul.f32 %v2063, 0.11111111
        %v2144 = vmul.f32 %v2064, 0.11111111
        %v2145 = vmul.f32 %v2065, 0.11111111
        %v2146 = vmul.f32 %v2066, 0.11111111
        %v2147 = vmul.f32 %v2067, 0.11111111
        %v2148 = vmul.f32 %v2068, 0.11111111
        %v2149 = vmul.f32 %v2069, 0.11111111
        %v2150 = vmul.f32 %v2070, 0.11111111
        %v2151 = vmul.f32 %v2071, 0.11111111
        %v2152 = vmul.f32 %v2072, 0.11111111
        %v2153 = vmul.f32 %v2073, 0.11111111
        %v2154 = vmul.f32 %v2074, 0.11111111
        %v2155 = vmul.f32 %v2075, 0.11111111
        %v2156 = vmul.f32 %v2076, 0.11111111
        %v2157 = vmul.f32 %v2077, 0.11111111
        %v2158 = vmul.f32 %v2078, 0.11111111
        %v2159 = vmul.f32 %v2079, 0.11111111
        %v2160 = vmul.f32 %v2080, 0.11111111
        %v2161 = vmul.f32 %v2081, 0.11111111
        %v2162 = vmul.f32 %v2082, 0.11111111
        %v2163 = vmul.f32 %v2083, 0.11111111
        %v2164 = vmul.f32 %v2084, 0.11111111
        %v2165 = vmul.f32 %v2085, 0.11111111
        %v2166 = vmul.f32 %v2086, 0.11111111
        %v2167 = vmul.f32 %v2087, 0.11111111
        %v2168 = vmul.f32 %v2088, 0.11111111
        %v2169 = vmul.f32 %v2089, 0.11111111
        %v2170 = vmul.f32 %v2090, 0.11111111
        %v2171 = vmul.f32 %v2091, 0.11111111
        %v2172 = vmul.f32 %v2092, 0.11111111
        %v2173 = vmul.f32 %v2093, 0.11111111
        %v2174 = vmul.f32 %v2094, 0.11111111
        %v2175 = vmul.f32 %v2095, 0.11111111
        %v2176 = vmul.f32 %v2096, 0.11111111
        %v2177 = vmul.f32 %v2097, 0.11111111
        %v2178 = vmul.f32 %v2098, 0.11111111
        %v2179 = vmul.f32 %v2099, 0.11111111
        %v2180 = vmul.f32 %v2100, 0.11111111
        %v2181 = vmul.f32 %v2101, 0.11111111
        %v2182 = vmul.f32 %v2102, 0.11111111
        %v2183 = vmul.f32 %v2103, 0.11111111
        %v2184 = vmul.f32 %v2104, 0.11111111
        %v2185 = vmul.f32 %v2105, 0.11111111
        %v2186 = vmul.f32 %v2106, 0.11111111
        %v2187 = vmul.f32 %v2107, 0.11111111
        %v2188 = vmul.f32 %v2108, 0.11111111
        %v2189 = vmul.f32 %v2109, 0.11111111
        %v2190 = vmul.f32 %v2110, 0.11111111
        %v2191 = vmul.f32 %v2111, 0.11111111
        %v2192 = vmul.f32 %v2112, 0.11111111
        %v2193 = vmul.f32 %v2113, 0.11111111
        %v2194 = vmul.f32 %v2114, %v2114
        %v2195 = vmul.f32 %v2115, %v2115
        %v2196 = vmul.f32 %v2116, %v2116
        %v2197 = vmul.f32 %v2117, %v2117
        %v2198 = vmul.f32 %v2118, %v2118
        %v2199 = vmul.f32 %v2119, %v2119
        %v2200 = vmul.f32 %v2120, %v2120
        %v2201 = vmul.f32 %v2121, %v2121
        %v2202 = vmul.f32 %v2122, %v2122
        %v2203 = vmul.f32 %v2123, %v2123
        %v2204 = vmul.f32 %v2124, %v2124
        %v2205 = vmul.f32 %v2125, %v2125
        %v2206 = vmul.f32 %v2126, %v2126
        %v2207 = vmul.f32 %v2127, %v2127
        %v2208 = vmul.f32 %v2128, %v2128
        %v2209 = vmul.f32 %v2129, %v2129
        %v2210 = vsub.f32 %v2146, %v2194
        %v2211 = vsub.f32 %v2147, %v2195
        %v2212 = vsub.f32 %v2148, %v2196
        %v2213 = vsub.f32 %v2149, %v2197
        %v2214 = vsub.f32 %v2150, %v2198
        %v2215 = vsub.f32 %v2151, %v2199
        %v2216 = vsub.f32 %v2152, %v2200
        %v2217 = vsub.f32 %v2153, %v2201
        %v2218 = vsub.f32 %v2154, %v2202
        %v2219 = vsub.f32 %v2155, %v2203
        %v2220 = vsub.f32 %v2156, %v2204
        %v2221 = vsub.f32 %v2157, %v2205
        %v2222 = vsub.f32 %v2158, %v2206
        %v2223 = vsub.f32 %v2159, %v2207
        %v2224 = vsub.f32 %v2160, %v2208
        %v2225 = vsub.f32 %v2161, %v2209
        %v2226 = vmul.f32 %v2130, %v2130
        %v2227 = vmul.f32 %v2131, %v2131
        %v2228 = vmul.f32 %v2132, %v2132
        %v2229 = vmul.f32 %v2133, %v2133
        %v2230 = vmul.f32 %v2134, %v2134
        %v2231 = vmul.f32 %v2135, %v2135
        %v2232 = vmul.f32 %v2136, %v2136
        %v2233 = vmul.f32 %v2137, %v2137
        %v2234 = vmul.f32 %v2138, %v2138
        %v2235 = vmul.f32 %v2139, %v2139
        %v2236 = vmul.f32 %v2140, %v2140
        %v2237 = vmul.f32 %v2141, %v2141
        %v2238 = vmul.f32 %v2142, %v2142
        %v2239 = vmul.f32 %v2143, %v2143
        %v2240 = vmul.f32 %v2144, %v2144
        %v2241 = vmul.f32 %v2145, %v2145
        %v2242 = vsub.f32 %v2162, %v2226
        %v2243 = vsub.f32 %v2163, %v2227
        %v2244 = vsub.f32 %v2164, %v2228
        %v2245 = vsub.f32 %v2165, %v2229
        %v2246 = vsub.f32 %v2166, %v2230
        %v2247 = vsub.f32 %v2167, %v2231
        %v2248 = vsub.f32 %v2168, %v2232
        %v2249 = vsub.f32 %v2169, %v2233
        %v2250 = vsub.f32 %v2170, %v2234
        %v2251 = vsub.f32 %v2171, %v2235
        %v2252 = vsub.f32 %v2172, %v2236
        %v2253 = vsub.f32 %v2173, %v2237
        %v2254 = vsub.f32 %v2174, %v2238
        %v2255 = vsub.f32 %v2175, %v2239
        %v2256 = vsub.f32 %v2176, %v2240
        %v2257 = vsub.f32 %v2177, %v2241
        %v2258 = vmul.f32 %v2114, %v2130
        %v2259 = vmul.f32 %v2115, %v2131
        %v2260 = vmul.f32 %v2116, %v2132
        %v2261 = vmul.f32 %v2117, %v2133
        %v2262 = vmul.f32 %v2118, %v2134
        %v2263 = vmul.f32 %v2119, %v2135
        %v2264 = vmul.f32 %v2120, %v2136
        %v2265 = vmul.f32 %v2121, %v2137
        %v2266 = vmul.f32 %v2122, %v2138
        %v2267 = vmul.f32 %v2123, %v2139
        %v2268 = vmul.f32 %v2124, %v2140
        %v2269 = vmul.f32 %v2125, %v2141
        %v2270 = vmul.f32 %v2126, %v2142
        %v2271 = vmul.f32 %v2127, %v2143
        %v2272 = vmul.f32 %v2128, %v2144
        %v2273 = vmul.f32 %v2129, %v2145
        %v2274 = vsub.f32 %v2178, %v2258
        %v2275 = vsub.f32 %v2179, %v2259
        %v2276 = vsub.f32 %v2180, %v2260
        %v2277 = vsub.f32 %v2181, %v2261
        %v2278 = vsub.f32 %v2182, %v2262
        %v2279 = vsub.f32 %v2183, %v2263
        %v2280 = vsub.f32 %v2184, %v2264
        %v2281 = vsub.f32 %v2185, %v2265
        %v2282 = vsub.f32 %v2186, %v2266
        %v2283 = vsub.f32 %v2187, %v2267
        %v2284 = vsub.f32 %v2188, %v2268
        %v2285 = vsub.f32 %v2189, %v2269
        %v2286 = vsub.f32 %v2190, %v2270
        %v2287 = vsub.f32 %v2191, %v2271
        %v2288 = vsub.f32 %v2192, %v2272
        %v2289 = vsub.f32 %v2193, %v2273
        %v2290 = vmul.f32 %v2114, 2.0
        %v2291 = vmul.f32 %v2115, 2.0
        %v2292 = vmul.f32 %v2116, 2.0
        %v2293 = vmul.f32 %v2117, 2.0
        %v2294 = vmul.f32 %v2118, 2.0
        %v2295 = vmul.f32 %v2119, 2.0
        %v2296 = vmul.f32 %v2120, 2.0
        %v2297 = vmul.f32 %v2121, 2.0
        %v2298 = vmul.f32 %v2122, 2.0
        %v2299 = vmul.f32 %v2123, 2.0
        %v2300 = vmul.f32 %v2124, 2.0
        %v2301 = vmul.f32 %v2125, 2.0
        %v2302 = vmul.f32 %v2126, 2.0
        %v2303 = vmul.f32 %v2127, 2.0
        %v2304 = vmul.f32 %v2128, 2.0
        %v2305 = vmul.f32 %v2129, 2.0
        %v2306 = vmul.f32 %v2290, %v2130
        %v2307 = vmul.f32 %v2291, %v2131
        %v2308 = vmul.f32 %v2292, %v2132
        %v2309 = vmul.f32 %v2293, %v2133
        %v2310 = vmul.f32 %v2294, %v2134
        %v2311 = vmul.f32 %v2295, %v2135
        %v2312 = vmul.f32 %v2296, %v2136
        %v2313 = vmul.f32 %v2297, %v2137
        %v2314 = vmul.f32 %v2298, %v2138
        %v2315 = vmul.f32 %v2299, %v2139
        %v2316 = vmul.f32 %v2300, %v2140
        %v2317 = vmul.f32 %v2301, %v2141
        %v2318 = vmul.f32 %v2302, %v2142
        %v2319 = vmul.f32 %v2303, %v2143
        %v2320 = vmul.f32 %v2304, %v2144
        %v2321 = vmul.f32 %v2305, %v2145
        %v2322 = vadd.f32 %v2306, 0.0001
        %v2323 = vadd.f32 %v2307, 0.0001
        %v2324 = vadd.f32 %v2308, 0.0001
        %v2325 = vadd.f32 %v2309, 0.0001
        %v2326 = vadd.f32 %v2310, 0.0001
        %v2327 = vadd.f32 %v2311, 0.0001
        %v2328 = vadd.f32 %v2312, 0.0001
        %v2329 = vadd.f32 %v2313, 0.0001
        %v2330 = vadd.f32 %v2314, 0.0001
        %v2331 = vadd.f32 %v2315, 0.0001
        %v2332 = vadd.f32 %v2316, 0.0001
        %v2333 = vadd.f32 %v2317, 0.0001
        %v2334 = vadd.f32 %v2318, 0.0001
        %v2335 = vadd.f32 %v2319, 0.0001
        %v2336 = vadd.f32 %v2320, 0.0001
        %v2337 = vadd.f32 %v2321, 0.0001
        %v2338 = vmul.f32 %v2274, 2.0
        %v2339 = vmul.f32 %v2275, 2.0
        %v2340 = vmul.f32 %v2276, 2.0
        %v2341 = vmul.f32 %v2277, 2.0
        %v2342 = vmul.f32 %v2278, 2.0
        %v2343 = vmul.f32 %v2279, 2.0
        %v2344 = vmul.f32 %v2280, 2.0
        %v2345 = vmul.f32 %v2281, 2.0
        %v2346 = vmul.f32 %v2282, 2.0
        %v2347 = vmul.f32 %v2283, 2.0
        %v2348 = vmul.f32 %v2284, 2.0
        %v2349 = vmul.f32 %v2285, 2.0
        %v2350 = vmul.f32 %v2286, 2.0
        %v2351 = vmul.f32 %v2287, 2.0
        %v2352 = vmul.f32 %v2288, 2.0
        %v2353 = vmul.f32 %v2289, 2.0
        %v2354 = vadd.f32 %v2338, 0.0009
        %v2355 = vadd.f32 %v2339, 0.0009
        %v2356 = vadd.f32 %v2340, 0.0009
        %v2357 = vadd.f32 %v2341, 0.0009
        %v2358 = vadd.f32 %v2342, 0.0009
        %v2359 = vadd.f32 %v2343, 0.0009
        %v2360 = vadd.f32 %v2344, 0.0009
        %v2361 = vadd.f32 %v2345, 0.0009
        %v2362 = vadd.f32 %v2346, 0.0009
        %v2363 = vadd.f32 %v2347, 0.0009
        %v2364 = vadd.f32 %v2348, 0.0009
        %v2365 = vadd.f32 %v2349, 0.0009
        %v2366 = vadd.f32 %v2350, 0.0009
        %v2367 = vadd.f32 %v2351, 0.0009
        %v2368 = vadd.f32 %v2352, 0.0009
        %v2369 = vadd.f32 %v2353, 0.0009
        %v2370 = vmul.f32 %v2322, %v2354
        %v2371 = vmul.f32 %v2323, %v2355
        %v2372 = vmul.f32 %v2324, %v2356
        %v2373 = vmul.f32 %v2325, %v2357
        %v2374 = vmul.f32 %v2326, %v2358
        %v2375 = vmul.f32 %v2327, %v2359
        %v2376 = vmul.f32 %v2328, %v2360
        %v2377 = vmul.f32 %v2329, %v2361
        %v2378 = vmul.f32 %v2330, %v2362
        %v2379 = vmul.f32 %v2331, %v2363
        %v2380 = vmul.f32 %v2332, %v2364
        %v2381 = vmul.f32 %v2333, %v2365
        %v2382 = vmul.f32 %v2334, %v2366
        %v2383 = vmul.f32 %v2335, %v2367
        %v2384 = vmul.f32 %v2336, %v2368
        %v2385 = vmul.f32 %v2337, %v2369
        %v2386 = vadd.f32 %v2194, %v2226
        %v2387 = vadd.f32 %v2195, %v2227
        %v2388 = vadd.f32 %v2196, %v2228
        %v2389 = vadd.f32 %v2197, %v2229
        %v2390 = vadd.f32 %v2198, %v2230
        %v2391 = vadd.f32 %v2199, %v2231
        %v2392 = vadd.f32 %v2200, %v2232
        %v2393 = vadd.f32 %v2201, %v2233
        %v2394 = vadd.f32 %v2202, %v2234
        %v2395 = vadd.f32 %v2203, %v2235
        %v2396 = vadd.f32 %v2204, %v2236
        %v2397 = vadd.f32 %v2205, %v2237
        %v2398 = vadd.f32 %v2206, %v2238
        %v2399 = vadd.f32 %v2207, %v2239
        %v2400 = vadd.f32 %v2208, %v2240
        %v2401 = vadd.f32 %v2209, %v2241
        %v2402 = vadd.f32 %v2386, 0.0001
        %v2403 = vadd.f32 %v2387, 0.0001
        %v2404 = vadd.f32 %v2388, 0.0001
        %v2405 = vadd.f32 %v2389, 0.0001
        %v2406 = vadd.f32 %v2390, 0.0001
        %v2407 = vadd.f32 %v2391, 0.0001
        %v2408 = vadd.f32 %v2392, 0.0001
        %v2409 = vadd.f32 %v2393, 0.0001
        %v2410 = vadd.f32 %v2394, 0.0001
        %v2411 = vadd.f32 %v2395, 0.0001
        %v2412 = vadd.f32 %v2396, 0.0001
        %v2413 = vadd.f32 %v2397, 0.0001
        %v2414 = vadd.f32 %v2398, 0.0001
        %v2415 = vadd.f32 %v2399, 0.0001
        %v2416 = vadd.f32 %v2400, 0.0001
        %v2417 = vadd.f32 %v2401, 0.0001
        %v2418 = vadd.f32 %v2210, %v2242
        %v2419 = vadd.f32 %v2211, %v2243
        %v2420 = vadd.f32 %v2212, %v2244
        %v2421 = vadd.f32 %v2213, %v2245
        %v2422 = vadd.f32 %v2214, %v2246
        %v2423 = vadd.f32 %v2215, %v2247
        %v2424 = vadd.f32 %v2216, %v2248
        %v2425 = vadd.f32 %v2217, %v2249
        %v2426 = vadd.f32 %v2218, %v2250
        %v2427 = vadd.f32 %v2219, %v2251
        %v2428 = vadd.f32 %v2220, %v2252
        %v2429 = vadd.f32 %v2221, %v2253
        %v2430 = vadd.f32 %v2222, %v2254
        %v2431 = vadd.f32 %v2223, %v2255
        %v2432 = vadd.f32 %v2224, %v2256
        %v2433 = vadd.f32 %v2225, %v2257
        %v2434 = vadd.f32 %v2418, 0.0009
        %v2435 = vadd.f32 %v2419, 0.0009
        %v2436 = vadd.f32 %v2420, 0.0009
        %v2437 = vadd.f32 %v2421, 0.0009
        %v2438 = vadd.f32 %v2422, 0.0009
        %v2439 = vadd.f32 %v2423, 0.0009
        %v2440 = vadd.f32 %v2424, 0.0009
        %v2441 = vadd.f32 %v2425, 0.0009
        %v2442 = vadd.f32 %v2426, 0.0009
        %v2443 = vadd.f32 %v2427, 0.0009
        %v2444 = vadd.f32 %v2428, 0.0009
        %v2445 = vadd.f32 %v2429, 0.0009
        %v2446 = vadd.f32 %v2430, 0.0009
        %v2447 = vadd.f32 %v2431, 0.0009
        %v2448 = vadd.f32 %v2432, 0.0009
        %v2449 = vadd.f32 %v2433, 0.0009
        %v2450 = vmul.f32 %v2402, %v2434
        %v2451 = vmul.f32 %v2403, %v2435
        %v2452 = vmul.f32 %v2404, %v2436
        %v2453 = vmul.f32 %v2405, %v2437
        %v2454 = vmul.f32 %v2406, %v2438
        %v2455 = vmul.f32 %v2407, %v2439
        %v2456 = vmul.f32 %v2408, %v2440
        %v2457 = vmul.f32 %v2409, %v2441
        %v2458 = vmul.f32 %v2410, %v2442
        %v2459 = vmul.f32 %v2411, %v2443
        %v2460 = vmul.f32 %v2412, %v2444
        %v2461 = vmul.f32 %v2413, %v2445
        %v2462 = vmul.f32 %v2414, %v2446
        %v2463 = vmul.f32 %v2415, %v2447
        %v2464 = vmul.f32 %v2416, %v2448
        %v2465 = vmul.f32 %v2417, %v2449
        %v2466 = vrcp.pop %v2450
        %v2467 = vrcp.pop %v2451
        %v2468 = vrcp.pop %v2452
        %v2469 = vrcp.pop %v2453
        %v2470 = vrcp.pop %v2454
        %v2471 = vrcp.pop %v2455
        %v2472 = vrcp.pop %v2456
        %v2473 = vrcp.pop %v2457
        %v2474 = vrcp.pop %v2458
        %v2475 = vrcp.pop %v2459
        %v2476 = vrcp.pop %v2460
        %v2477 = vrcp.pop %v2461
        %v2478 = vrcp.pop %v2462
        %v2479 = vrcp.pop %v2463
        %v2480 = vrcp.pop %v2464
        %v2481 = vrcp.pop %v2465
        %v2482 = vmul.f32 %v2450, %v2466
        %v2483 = vmul.f32 %v2451, %v2467
        %v2484 = vmul.f32 %v2452, %v2468
        %v2485 = vmul.f32 %v2453, %v2469
        %v2486 = vmul.f32 %v2454, %v2470
        %v2487 = vmul.f32 %v2455, %v2471
        %v2488 = vmul.f32 %v2456, %v2472
        %v2489 = vmul.f32 %v2457, %v2473
        %v2490 = vmul.f32 %v2458, %v2474
        %v2491 = vmul.f32 %v2459, %v2475
        %v2492 = vmul.f32 %v2460, %v2476
        %v2493 = vmul.f32 %v2461, %v2477
        %v2494 = vmul.f32 %v2462, %v2478
        %v2495 = vmul.f32 %v2463, %v2479
        %v2496 = vmul.f32 %v2464, %v2480
        %v2497 = vmul.f32 %v2465, %v2481
        %v2498 = vsub.f32 2.0, %v2482
        %v2499 = vsub.f32 2.0, %v2483
        %v2500 = vsub.f32 2.0, %v2484
        %v2501 = vsub.f32 2.0, %v2485
        %v2502 = vsub.f32 2.0, %v2486
        %v2503 = vsub.f32 2.0, %v2487
        %v2504 = vsub.f32 2.0, %v2488
        %v2505 = vsub.f32 2.0, %v2489
        %v2506 = vsub.f32 2.0, %v2490
        %v2507 = vsub.f32 2.0, %v2491
        %v2508 = vsub.f32 2.0, %v2492
        %v2509 = vsub.f32 2.0, %v2493
        %v2510 = vsub.f32 2.0, %v2494
        %v2511 = vsub.f32 2.0, %v2495
        %v2512 = vsub.f32 2.0, %v2496
        %v2513 = vsub.f32 2.0, %v2497
        %v2514 = vmul.f32 %v2466, %v2498
        %v2515 = vmul.f32 %v2467, %v2499
        %v2516 = vmul.f32 %v2468, %v2500
        %v2517 = vmul.f32 %v2469, %v2501
        %v2518 = vmul.f32 %v2470, %v2502
        %v2519 = vmul.f32 %v2471, %v2503
        %v2520 = vmul.f32 %v2472, %v2504
        %v2521 = vmul.f32 %v2473, %v2505
        %v2522 = vmul.f32 %v2474, %v2506
        %v2523 = vmul.f32 %v2475, %v2507
        %v2524 = vmul.f32 %v2476, %v2508
        %v2525 = vmul.f32 %v2477, %v2509
        %v2526 = vmul.f32 %v2478, %v2510
        %v2527 = vmul.f32 %v2479, %v2511
        %v2528 = vmul.f32 %v2480, %v2512
        %v2529 = vmul.f32 %v2481, %v2513
        %v2530 = vmul.f32 %v2370, %v2514
        %v2531 = vmul.f32 %v2371, %v2515
        %v2532 = vmul.f32 %v2372, %v2516
        %v2533 = vmul.f32 %v2373, %v2517
        %v2534 = vmul.f32 %v2374, %v2518
        %v2535 = vmul.f32 %v2375, %v2519
        %v2536 = vmul.f32 %v2376, %v2520
        %v2537 = vmul.f32 %v2377, %v2521
        %v2538 = vmul.f32 %v2378, %v2522
        %v2539 = vmul.f32 %v2379, %v2523
        %v2540 = vmul.f32 %v2380, %v2524
        %v2541 = vmul.f32 %v2381, %v2525
        %v2542 = vmul.f32 %v2382, %v2526
        %v2543 = vmul.f32 %v2383, %v2527
        %v2544 = vmul.f32 %v2384, %v2528
        %v2545 = vmul.f32 %v2385, %v2529
        %v2546 = vsub.f32 1.0, %v2530
        %v2547 = vsub.f32 1.0, %v2531
        %v2548 = vsub.f32 1.0, %v2532
        %v2549 = vsub.f32 1.0, %v2533
        %v2550 = vsub.f32 1.0, %v2534
        %v2551 = vsub.f32 1.0, %v2535
        %v2552 = vsub.f32 1.0, %v2536
        %v2553 = vsub.f32 1.0, %v2537
        %v2554 = vsub.f32 1.0, %v2538
        %v2555 = vsub.f32 1.0, %v2539
        %v2556 = vsub.f32 1.0, %v2540
        %v2557 = vsub.f32 1.0, %v2541
        %v2558 = vsub.f32 1.0, %v2542
        %v2559 = vsub.f32 1.0, %v2543
        %v2560 = vsub.f32 1.0, %v2544
        %v2561 = vsub.f32 1.0, %v2545
        %v2562 = vmul.f32 %v2546, 0.5
        %v2563 = vmul.f32 %v2547, 0.5
        %v2564 = vmul.f32 %v2548, 0.5
        %v2565 = vmul.f32 %v2549, 0.5
        %v2566 = vmul.f32 %v2550, 0.5
        %v2567 = vmul.f32 %v2551, 0.5
        %v2568 = vmul.f32 %v2552, 0.5
        %v2569 = vmul.f32 %v2553, 0.5
        %v2570 = vmul.f32 %v2554, 0.5
        %v2571 = vmul.f32 %v2555, 0.5
        %v2572 = vmul.f32 %v2556, 0.5
        %v2573 = vmul.f32 %v2557, 0.5
        %v2574 = vmul.f32 %v2558, 0.5
        %v2575 = vmul.f32 %v2559, 0.5
        %v2576 = vmul.f32 %v2560, 0.5
        %v2577 = vmul.f32 %v2561, 0.5
        %v2578 = vmax.f32 %v2562, 0.0
        %v2579 = vmax.f32 %v2563, 0.0
        %v2580 = vmax.f32 %v2564, 0.0
        %v2581 = vmax.f32 %v2565, 0.0
        %v2582 = vmax.f32 %v2566, 0.0
        %v2583 = vmax.f32 %v2567, 0.0
        %v2584 = vmax.f32 %v2568, 0.0
        %v2585 = vmax.f32 %v2569, 0.0
        %v2586 = vmax.f32 %v2570, 0.0
        %v2587 = vmax.f32 %v2571, 0.0
        %v2588 = vmax.f32 %v2572, 0.0
        %v2589 = vmax.f32 %v2573, 0.0
        %v2590 = vmax.f32 %v2574, 0.0
        %v2591 = vmax.f32 %v2575, 0.0
        %v2592 = vmax.f32 %v2576, 0.0
        %v2593 = vmax.f32 %v2577, 0.0
        %v2594 = vmin.f32 %v2578, 1.0
        %v2595 = vmin.f32 %v2579, 1.0
        %v2596 = vmin.f32 %v2580, 1.0
        %v2597 = vmin.f32 %v2581, 1.0
        %v2598 = vmin.f32 %v2582, 1.0
        %v2599 = vmin.f32 %v2583, 1.0
        %v2600 = vmin.f32 %v2584, 1.0
        %v2601 = vmin.f32 %v2585, 1.0
        %v2602 = vmin.f32 %v2586, 1.0
        %v2603 = vmin.f32 %v2587, 1.0
        %v2604 = vmin.f32 %v2588, 1.0
        %v2605 = vmin.f32 %v2589, 1.0
        %v2606 = vmin.f32 %v2590, 1.0
        %v2607 = vmin.f32 %v2591, 1.0
        %v2608 = vmin.f32 %v2592, 1.0
        %v2609 = vmin.f32 %v2593, 1.0
        %v2610 = vld [vmem:[%s265] sm:$0xff]
        %v2611 = vld [vmem:[%s265 + $0x8] sm:$0xff]
        %v2612 = vsel %vm347, %v2594, 0.0
        %v2613 = vsel %vm347, %v2596, 0.0
        %v2614 = vadd.f32 %v2612, %v2613
        %v2615 = vsel %vm347, %v2598, 0.0
        %v2616 = vadd.f32 %v2614, %v2615
        %v2617 = vsel %vm347, %v2600, 0.0
        %v2618 = vadd.f32 %v2616, %v2617
        %v2619 = vsel %vm347, %v2602, 0.0
        %v2620 = vadd.f32 %v2618, %v2619
        %v2621 = vsel %vm347, %v2604, 0.0
        %v2622 = vadd.f32 %v2620, %v2621
        %v2623 = vsel %vm347, %v2606, 0.0
        %v2624 = vadd.f32 %v2622, %v2623
        %v2625 = vsel %vm347, %v2608, 0.0
        %v2626 = vadd.f32 %v2624, %v2625
        %v2627 = vsel %vm347, %v2595, 0.0
        %v2628 = vsel %vm347, %v2597, 0.0
        %v2629 = vadd.f32 %v2627, %v2628
        %v2630 = vsel %vm347, %v2599, 0.0
        %v2631 = vadd.f32 %v2629, %v2630
        %v2632 = vsel %vm347, %v2601, 0.0
        %v2633 = vadd.f32 %v2631, %v2632
        %v2634 = vsel %vm347, %v2603, 0.0
        %v2635 = vadd.f32 %v2633, %v2634
        %v2636 = vsel %vm347, %v2605, 0.0
        %v2637 = vadd.f32 %v2635, %v2636
        %v2638 = vsel %vm347, %v2607, 0.0
        %v2639 = vadd.f32 %v2637, %v2638
        %v2640 = vsel %vm347, %v2609, 0.0
        %v2641 = vadd.f32 %v2639, %v2640
        %v2642 = vadd.f32 %v2610, %v2626
        %v2643 = vadd.f32 %v2611, %v2641
        %2644 = vst.msk [vmem:[%s265] sm:$0xff] %vm347, %v2642
        %2645 = vst.msk [vmem:[%s265 + $0x8] sm:$0xff] %vm347, %v2643
        %s2646 = sand.u32 %s107, 1
        %s2647 = scalar_lea.sflag [#allocation4], %s2646
        %s2648 = sand.u32 %s107, 1
        %s2649 = smul.addr %s2648, 16
        %s2650 = scalar_lea.vmem [#allocation7], %s2649
        %s2651 = sand.u32 %s133, 1
        %s2652 = scalar_lea.sflag [#allocation9], %s2651
        %s2653 = sand.u32 %s133, 1
        %s2654 = smul.addr %s2653, 16
        %s2655 = scalar_lea.vmem [#allocation8], %s2654
        // Predicated region
        $region41: #{tpu_custom_call.1} parent=27 // pred_check
          %p2656 = pneg %p117
        $region42: #{tpu_custom_call.1} parent=27 // pred_check_branch
          %2658 = sbr.rel (%p2656) target = $region44
        $region43: #{tpu_custom_call.1} parent=27 // pred_region
          %s2660 = ssub.s32 256, 256
          %2661 = vsyncadd %s2647, %s2660
          %s2662 = smul.addr %s31, 2
          %s2663 = smul.addr %s2662, 128
          %s2664 = scalar_lea.hbm %s2, %s2663
          %s2665 = sshll.u32 %s2650, 4
          %s2666 = int_to_ptr.vmem [resolvable:$true] %s2665
          %2671 = dma.vmem_to_hbm [thread:$0]  %s2666, 256, %s2664, %s2647, 128, 128, 8
        $region44: #{tpu_custom_call.1} parent=27 // pred_fallthru
          _
        // Predicated region
        $region45: #{tpu_custom_call.1} parent=27 // pred_check
          %p2672 = pneg %p143
        $region46: #{tpu_custom_call.1} parent=27 // pred_check_branch
          %2674 = sbr.rel (%p2672) target = $region48
        $region47: #{tpu_custom_call.1} parent=27 // pred_region
          %s2676 = ssub.s32 256, 256
          %2677 = vsyncadd %s2652, %s2676
          %s2678 = smul.addr %s31, 2
          %s2679 = smul.addr %s2678, 128
          %s2680 = scalar_lea.hbm %s3, %s2679
          %s2681 = sshll.u32 %s2655, 4
          %s2682 = int_to_ptr.vmem [resolvable:$true] %s2681
          %2687 = dma.vmem_to_hbm [thread:$0]  %s2682, 256, %s2680, %s2652, 128, 128, 8
        $region48: #{tpu_custom_call.1} parent=27 // pred_fallthru
          _
      $region28: #{tpu_custom_call.1} parent=5 // pred_fallthru
        _
      %p2688 = scmp.le.s32.totalorder 2, %s22
      // Predicated region
      $region49: #{tpu_custom_call.1} parent=5 // pred_check
        %p2689 = pneg %p2688
      $region50: #{tpu_custom_call.1} parent=5 // pred_check_branch
        %2691 = sbr.rel (%p2689) target = $region52
      $region51: #{tpu_custom_call.1} parent=5 // pred_region
        %s2692 = ssub.s32 %s22, 2
        // Predicated region
        $region53: #{tpu_custom_call.1} parent=51 // pred_check
          %p2693 = pneg %p123
        $region54: #{tpu_custom_call.1} parent=51 // pred_check_branch
          %2695 = sbr.rel (%p2693) target = $region56
        $region55: #{tpu_custom_call.1} parent=51 // pred_region
          %s2696 = sand.u32 %s108, 1
          %s2697 = scalar_lea.sflag [#allocation4], %s2696
          %s2698 = sand.u32 %s108, 1
          %s2699 = smul.addr %s2698, 16
          %s2700 = scalar_lea.vmem [#allocation7], %s2699
          %2701 = dma.done %s2697, 256
        $region56: #{tpu_custom_call.1} parent=51 // pred_fallthru
          _
        // Predicated region
        $region57: #{tpu_custom_call.1} parent=51 // pred_check
          %p2702 = pneg %p149
        $region58: #{tpu_custom_call.1} parent=51 // pred_check_branch
          %2704 = sbr.rel (%p2702) target = $region60
        $region59: #{tpu_custom_call.1} parent=51 // pred_region
          %s2705 = sand.u32 %s134, 1
          %s2706 = scalar_lea.sflag [#allocation9], %s2705
          %s2707 = sand.u32 %s134, 1
          %s2708 = smul.addr %s2707, 16
          %s2709 = scalar_lea.vmem [#allocation8], %s2708
          %2710 = dma.done %s2706, 256
        $region60: #{tpu_custom_call.1} parent=51 // pred_fallthru
          _
      $region52: #{tpu_custom_call.1} parent=5 // pred_fallthru
        _
    $region6: #{tpu_custom_call.1} parent=1 // loop_footer
      %s26 = sadd.s32 1, %s22
    $region7: #{tpu_custom_call.1} parent=1 // loop_footer_branch
      %21 = sbr.rel target = $region3
    $region8: #{tpu_custom_call.1} parent=1 // loop_exit
      _
    %2711 = vsyncpa [#allocation3], 1
    %s2712 = scalar_lea.sflag [#allocation3], 1
    %2713 = vsyncpa %s2712, 1
    %2714 = vsyncpa [#allocation6], 1
    %s2715 = scalar_lea.sflag [#allocation6], 1
    %2716 = vsyncpa %s2715, 1
    %2717 = vsyncpa [#allocation4], 1
    %s2718 = scalar_lea.sflag [#allocation4], 1
    %2719 = vsyncpa %s2718, 1
    %2720 = vsyncpa [#allocation9], 1
    %s2721 = scalar_lea.sflag [#allocation9], 1
    %2722 = vsyncpa %s2721, 1

</llo_original>
